<compile_context>
chip_gen: v7x
topology: tpu7x:2x2x1
jax: 0.10.0
libtpu: 0.0.40
codegen_flags: <defaults>
</compile_context>

<pallas_src>
import functools

import numpy as np
import jax
import jax.numpy as jnp
from jax.experimental import pallas as pl
from jax.experimental.pallas import tpu as pltpu

_OUT_LANES = 128   # lane-dense output row; lane i holds loss scalar i


# ------------------------------ in-kernel math -------------------------------

def _pow(x, g):
    g = float(g)
    if g == 2.0:
        return x * x
    if g == 1.0:
        return x
    return x ** g


def _three_focal_sum(x, t, alpha, gamma):
    """sum( -alpha * (1 - softmax(x, axis=1))**gamma * t * log_softmax(x, axis=1) )."""
    m = jnp.max(x, axis=1, keepdims=True)          # reduce over queries (leading axis, VPU-only)
    xs = x - m
    e = jnp.exp(xs)
    s = jnp.sum(e, axis=1, keepdims=True)
    log_probs = xs - jnp.log(s)
    probs = e * pl.reciprocal(s, approx=True)      # EUP reciprocal instead of VPU divide
    loss = (-float(alpha)) * _pow(1.0 - probs, gamma) * t * log_probs
    return jnp.sum(loss)


def _sigmoid_focal_sum(x, t, alpha, gamma):
    """sum of sigmoid focal loss; one exp + one log per element."""
    en = jnp.exp(-jnp.abs(x))                                   # single EUP exp
    inv = pl.reciprocal(1.0 + en, approx=True)
    prob = jnp.where(x >= 0.0, inv, en * inv)                   # == sigmoid(x)
    ce = jnp.maximum(x, 0.0) - x * t + jnp.log(1.0 + en)        # stable BCE-with-logits
    p_t = prob * t + (1.0 - prob) * (1.0 - t)
    loss = ce * _pow(1.0 - p_t, gamma)
    if float(alpha) >= 0.0:
        loss = (float(alpha) * t + (1.0 - float(alpha)) * (1.0 - t)) * loss
    return jnp.sum(loss)


def _onehot_from_classes(tclass, shape):
    """Rebuild the sliced one-hot target in-kernel.

    `tclass` is int32 with a trailing size-1 class dim; entries equal to the no-object
    class (== C, one past the last real class) match nothing, reproducing torch's
    `one_hot[..., :-1]` slicing without materializing the one-hot tensor in HBM.
    """
    cls = jax.lax.broadcasted_iota(jnp.int32, shape, len(shape) - 1)
    return (cls == tclass).astype(jnp.float32)


def _make_fused_kernel(kinds, scales, alpha, gamma):
    def kernel(*refs):
        out_ref = refs[-1]
        in_refs = refs[:-1]
        vals = []
        r = 0
        for kind, scale in zip(kinds, scales):
            a_ref, b_ref = in_refs[r], in_refs[r + 1]
            r += 2
            if kind == "three_focal_cls":
                x = a_ref[...].astype(jnp.float32)
                t = _onehot_from_classes(b_ref[...], x.shape)
                vals.append(_three_focal_sum(x, t, alpha, gamma) * scale)
            elif kind == "sigmoid_focal_cls":
                x = a_ref[...].astype(jnp.float32)
                t = _onehot_from_classes(b_ref[...], x.shape)
                vals.append(_sigmoid_focal_sum(x, t, alpha, gamma) * scale)
            elif kind == "three_focal_dense":
                vals.append(_three_focal_sum(a_ref[...].astype(jnp.float32),
                                             b_ref[...].astype(jnp.float32),
                                             alpha, gamma) * scale)
            elif kind == "sigmoid_focal_dense":
                vals.append(_sigmoid_focal_sum(a_ref[...].astype(jnp.float32),
                                               b_ref[...].astype(jnp.float32),
                                               alpha, gamma) * scale)
            elif kind == "l1":
                vals.append(jnp.sum(jnp.abs(a_ref[...].astype(jnp.float32)
                                            - b_ref[...].astype(jnp.float32))) * scale)
            else:
                raise ValueError(f"unknown fused-loss kind: {kind}")
        # Pack all loss scalars into one lane-dense row -> one unmasked vector store.
        lane = jax.lax.broadcasted_iota(jnp.int32, (1, _OUT_LANES), 1)
        row = jnp.zeros((1, _OUT_LANES), jnp.float32)
        for i, v in enumerate(vals):
            row = row + jnp.where(lane == i, v, 0.0)
        out_ref[...] = row
    return kernel


def _zero_index_map(i, nd):
    return (0,) * nd


@functools.lru_cache(maxsize=None)
def _build_fused_call(kinds, scales, shapes, alpha, gamma):
    kernel = _make_fused_kernel(kinds, scales, alpha, gamma)
    in_specs = [
        pl.BlockSpec(s, functools.partial(_zero_index_map, nd=len(s))) for s in shapes
    ]
    return pl.pallas_call(
        kernel,
        out_shape=jax.ShapeDtypeStruct((1, _OUT_LANES), jnp.float32),
        grid=(1,),
        in_specs=in_specs,
        out_specs=pl.BlockSpec((1, _OUT_LANES), lambda i: (0, 0)),
        compiler_params=pltpu.CompilerParams(dimension_semantics=("arbitrary",)),
    )


def fused_losses(parts, alpha, gamma):
    """Run every loss reduction in `parts` inside ONE pallas_call.

    parts: list of {'kind': str, 'scale': float, 'arrays': (a, b)}.
    Returns one f32 scalar per part, in order.
    """
    assert 0 < len(parts) <= _OUT_LANES
    kinds = tuple(p["kind"] for p in parts)
    scales = tuple(float(p["scale"]) for p in parts)
    arrays = []
    for p in parts:
        arrays.extend(p["arrays"])
    shapes = tuple(tuple(int(d) for d in a.shape) for a in arrays)
    call = _build_fused_call(kinds, scales, shapes, float(alpha), float(gamma))
    out = call(*arrays)
    return [out[0, i] for i in range(len(parts))]


# ----------------- standalone loss functions (spec-compatible) ----------------

def three_focal_loss(inputs, targets, num_inst, alpha=0.25, gamma=2.0):
    if inputs.ndim == 4:
        denom = inputs.shape[1] * inputs.shape[2]
    elif inputs.ndim == 3:
        denom = inputs.shape[1]
    else:
        raise NotImplementedError(f"Unsupported dim {inputs.ndim}")
    scale = 1.0 / (float(denom) * float(num_inst))
    (val,) = fused_losses(
        [{"kind": "three_focal_dense", "scale": scale, "arrays": (inputs, targets)}],
        alpha, gamma)
    return val


def sigmoid_focal_loss(inputs, targets, num_inst, alpha=0.25, gamma=2.0):
    if inputs.ndim == 4:
        denom = inputs.shape[1] * inputs.shape[2]
    elif inputs.ndim == 3:
        denom = inputs.shape[1]
    else:
        raise NotImplementedError(f"Unsupported dim {inputs.ndim}")
    scale = 1.0 / (float(denom) * float(num_inst))
    (val,) = fused_losses(
        [{"kind": "sigmoid_focal_dense", "scale": scale, "arrays": (inputs, targets)}],
        alpha, gamma)
    return val


# ------------------------------- SetCriterion --------------------------------

class SetCriterion:
    def __init__(self, num_classes, points_num_classes, enc_matcher, dec_matcher,
                 weight_dict, enc_losses, dec_losses, num_ctrl_points, voc_size,
                 focal_alpha=0.25, focal_gamma=2.0):
        self.num_classes = num_classes
        self.points_num_classes = points_num_classes
        self.enc_matcher = enc_matcher
        self.dec_matcher = dec_matcher
        self.weight_dict = weight_dict
        self.enc_losses = enc_losses
        self.dec_losses = dec_losses
        self.focal_alpha = focal_alpha
        self.focal_gamma = focal_gamma
        self.num_ctrl_points = num_ctrl_points
        self.voc_size = voc_size

    # ----------------------- host-side index bookkeeping ----------------------
    @staticmethod
    def _get_src_permutation_idx(indices):
        batch_idx = np.concatenate(
            [np.full_like(np.asarray(src), i) for i, (src, _) in enumerate(indices)])
        src_idx = np.concatenate([np.asarray(src) for src, _ in indices])
        return batch_idx, src_idx

    def _filter_and_handle_empty_indices(self, indices, targets, target_label):
        filtered, non_empty = [], []
        for i, (src_idx, tgt_idx) in enumerate(indices):
            tgt_labels = np.asarray(targets[i]['labels'])
            src_idx = np.asarray(src_idx)
            tgt_idx = np.asarray(tgt_idx)
            mask = tgt_labels[tgt_idx] == target_label
            fs, ft = src_idx[mask], tgt_idx[mask]
            if len(fs) > 0 and len(ft) > 0:
                filtered.append((fs, ft))
                non_empty.append((fs, ft))
            else:
                filtered.append((np.array([], dtype=np.int64),
                                 np.array([], dtype=np.int64)))
        for i, (s, t) in enumerate(filtered):
            if len(s) == 0 or len(t) == 0:
                # TODO(synk): original uses random.choice; deterministic first non-empty here.
                filtered[i] = non_empty[0] if non_empty else (
                    np.array([0], dtype=np.int64), np.array([0], dtype=np.int64))
        return filtered

    # -------- "prep" helpers: build fused-kernel parts (no pallas_call here) ---
    def _prep_loss_labels(self, outputs, targets, indices, num_inst):
        src_logits = outputs['pred_logits']          # (bs, nq, n_ctrl, points_num_classes)
        assert src_logits.ndim == 4
        bs, nq, n_ctrl, _ = src_logits.shape
        batch_idx, src_idx = self._get_src_permutation_idx(indices)
        target_classes_o = np.concatenate(
            [np.asarray(t['labels'])[np.asarray(J)]
             for t, (_, J) in zip(targets, indices)]).astype(np.int32)
        target_classes = np.full((bs, nq, n_ctrl), self.points_num_classes, dtype=np.int32)
        target_classes[batch_idx, src_idx] = target_classes_o[:, None]   # broadcast over ctrl pts
        # fold three_focal_loss(...)/num_inst * nq into one scale constant
        scale = float(nq) / (float(nq * n_ctrl) * float(num_inst))
        # trailing size-1 class dim lets the kernel lane-broadcast against a class iota
        return {'kind': 'three_focal_cls', 'scale': scale,
                'arrays': (src_logits, target_classes[..., None])}

    def _prep_loss_ctrl_points(self, outputs, targets, indices, num_inst):
        batch_idx, src_idx = self._get_src_permutation_idx(indices)
        src_ctrl = outputs['pred_ctrl_points'][batch_idx, src_idx]       # (n, n_ctrl, 2)
        tgt_ctrl = jnp.concatenate(
            [t['ctrl_points'][np.asarray(i)] for t, (_, i) in zip(targets, indices)], axis=0)
        n = src_ctrl.shape[0]
        # flatten point coords into the lane axis (free contiguous reshape, lane-denser)
        return {'kind': 'l1', 'scale': 1.0 / float(num_inst),
                'arrays': (src_ctrl.reshape(n, -1), tgt_ctrl.reshape(n, -1))}

    def _prep_loss_labels_encoder(self, outputs, targets, indices, num_inst):
        src_logits = outputs['pred_logits']          # (bs, nq_enc, num_classes)
        assert src_logits.ndim == 3
        bs, nq, _ = src_logits.shape
        batch_idx, src_idx = self._get_src_permutation_idx(indices)
        target_classes_o = np.concatenate(
            [np.asarray(t['labels'])[np.asarray(J)]
             for t, (_, J) in zip(targets, indices)]).astype(np.int32)
        target_classes = np.full((bs, nq), self.num_classes, dtype=np.int32)
        target_classes[batch_idx, src_idx] = target_classes_o
        scale = float(nq) / (float(nq) * float(num_inst))
        return {'kind': 'sigmoid_focal_cls', 'scale': scale,
                'arrays': (src_logits, target_classes[..., None])}

    def _prep_dec_loss(self, loss, outputs, targets, indices, num_inst):
        if loss == 'labels':
            return ('loss_ce',
                    self._prep_loss_labels(outputs, targets, indices, num_inst))
        if loss == 'ctrl_points':
            return ('loss_ctrl_points',
                    self._prep_loss_ctrl_points(outputs, targets, indices, num_inst))
        # TODO(synk): 'boxes' (GIoU helpers not provided) and 'texts' (CTC) are not ported.
        raise AssertionError(f'do you really want to compute {loss} loss?')

    def loss_cardinality(self, outputs, targets, indices, num_inst):
        # logging-only in the original (@torch.no_grad); tiny, plain JAX
        pred_logits = outputs['pred_logits']
        tgt_lengths = jnp.asarray([len(v['labels']) for v in targets], dtype=jnp.float32)
        card_pred = jnp.sum(
            (jnp.argmax(jnp.mean(pred_logits, axis=-2), axis=-1) == 0).astype(jnp.float32),
            axis=1)
        card_err = jnp.mean(jnp.abs(card_pred - tgt_lengths))
        return {'cardinality_error': card_err}

    # ---------------------------------- forward --------------------------------
    def forward(self, outputs, targets, current_target):
        outputs_without_aux = {k: v for k, v in outputs.items()
                               if k != 'aux_outputs' and k != 'enc_outputs'}
        indices = self.dec_matcher(outputs_without_aux, targets)
        filtered_indices = self._filter_and_handle_empty_indices(indices, targets,
                                                                 target_label=1)
        current_indices = [(src_idx, np.zeros_like(tgt_idx))
                           for src_idx, tgt_idx in filtered_indices]

        # TODO(synk): torch.distributed all_reduce / world-size normalization not applicable.
        current_num_inst = max(float(sum(len(t['ctrl_points']) for t in current_target)), 1.0)
        num_inst = max(float(sum(len(t['ctrl_points']) for t in targets)), 1.0)

        losses = {}
        pending = []   # (loss_name, fused-kernel part); all evaluated in ONE pallas_call

        for loss in self.dec_losses:
            if loss == 'cardinality':
                losses.update(self.loss_cardinality(outputs, current_target,
                                                    current_indices, current_num_inst))
            else:
                pending.append(self._prep_dec_loss(loss, outputs, current_target,
                                                   current_indices, current_num_inst))

        if 'aux_outputs' in outputs:
            for i, aux_outputs in enumerate(outputs['aux_outputs']):
                aux_indices = self.dec_matcher(aux_outputs, current_target)
                for loss in self.dec_losses:
                    if loss == 'cardinality':
                        l_dict = self.loss_cardinality(aux_outputs, current_target,
                                                       aux_indices, current_num_inst)
                        losses.update({k + f'_{i}': v for k, v in l_dict.items()})
                    else:
                        name, part = self._prep_dec_loss(loss, aux_outputs, current_target,
                                                         aux_indices, current_num_inst)
                        pending.append((name + f'_{i}', part))

        if 'enc_outputs' in outputs:
            enc_outputs = outputs['enc_outputs']
            # original mutates targets in-place: labels[labels == 1] = 0
            targets = [dict(t, labels=np.where(np.asarray(t['labels']) == 1, 0,
                                               np.asarray(t['labels'])))
                       for t in targets]
            enc_indices = self.enc_matcher(enc_outputs, targets)
            for loss in self.enc_losses:
                # TODO(synk): encoder 'boxes' loss (GIoU) not ported.
                assert loss == 'labels', f'do you really want to compute {loss} loss?'
                pending.append(('loss_ce_enc',
                                self._prep_loss_labels_encoder(enc_outputs, targets,
                                                               enc_indices, num_inst)))

        if pending:
            vals = fused_losses([p for _, p in pending], self.focal_alpha, self.focal_gamma)
            for (name, _), v in zip(pending, vals):
                losses[name] = v
        return losses


# ------------------------------ synthetic setup -------------------------------

def identity_matcher(outputs, targets):
    # TODO(synk): the Hungarian matcher is an external module; deterministic identity match.
    inds = []
    for t in targets:
        n = int(np.asarray(t['labels']).shape[0])
        inds.append((np.arange(n, dtype=np.int64), np.arange(n, dtype=np.int64)))
    return inds


if __name__ == "__main__":
    key = jax.random.PRNGKey(0)
    bs, nq, n_ctrl, pts_C = 2, 8, 8, 3          # decoder: (bs, queries, ctrl points, point classes)
    nq_enc, num_classes = 16, 1                 # encoder: (bs, enc queries, classes)

    k1, k2, k3, k4, k5, k6, k7 = jax.random.split(key, 7)
    outputs = {
        'pred_logits': jax.random.normal(k1, (bs, nq, n_ctrl, pts_C), jnp.float32),
        'pred_ctrl_points': jax.random.uniform(k2, (bs, nq, n_ctrl, 2), jnp.float32),
        'aux_outputs': [{
            'pred_logits': jax.random.normal(k6, (bs, nq, n_ctrl, pts_C), jnp.float32),
            'pred_ctrl_points': jax.random.uniform(k7, (bs, nq, n_ctrl, 2), jnp.float32),
        }],
        'enc_outputs': {
            'pred_logits': jax.random.normal(k3, (bs, nq_enc, num_classes), jnp.float32),
            'pred_boxes': jax.random.uniform(k4, (bs, nq_enc, 4), jnp.float32),
        },
    }

    n_per_img = [3, 2]
    label_vals = [np.array([1, 0, 1], dtype=np.int64),
                  np.array([1, 1], dtype=np.int64)]
    targets = []
    kk = k5
    for i, n in enumerate(n_per_img):
        kk, sub = jax.random.split(kk)
        targets.append({
            'labels': label_vals[i],   # host-side metadata -> no device_get sync in forward
            'ctrl_points': jax.random.uniform(sub, (n, n_ctrl, 2), jnp.float32),
        })
    current_target = [dict(t) for t in targets]

    criterion = SetCriterion(
        num_classes=num_classes,
        points_num_classes=pts_C,
        enc_matcher=identity_matcher,
        dec_matcher=identity_matcher,
        weight_dict={},
        enc_losses=['labels'],
        dec_losses=['labels', 'ctrl_points'],
        num_ctrl_points=n_ctrl,
        voc_size=96,
        focal_alpha=0.25,
        focal_gamma=2.0,
    )

    losses = criterion.forward(outputs, targets, current_target)
    for v in jax.tree_util.tree_leaves(losses):
        jax.block_until_ready(v)
    print("KERNEL_OK")
</pallas_src>

<mosaic_0001>
module attributes {stable_mosaic.version = 11 : i64} {
  func.func @kernel(%arg0: i32, %arg1: memref<2x8x8x3xf32, #tpu.memory_space<vmem>>, %arg2: memref<2x8x8x1xi32, #tpu.memory_space<vmem>>, %arg3: memref<4x16xf32, #tpu.memory_space<vmem>>, %arg4: memref<4x16xf32, #tpu.memory_space<vmem>>, %arg5: memref<2x8x8x3xf32, #tpu.memory_space<vmem>>, %arg6: memref<2x8x8x1xi32, #tpu.memory_space<vmem>>, %arg7: memref<5x16xf32, #tpu.memory_space<vmem>>, %arg8: memref<5x16xf32, #tpu.memory_space<vmem>>, %arg9: memref<2x16x1xf32, #tpu.memory_space<vmem>>, %arg10: memref<2x16x1xi32, #tpu.memory_space<vmem>>, %arg11: memref<1x128xf32, #tpu.memory_space<vmem>>) attributes {dimension_semantics = [#tpu.dimension_semantics<arbitrary>], iteration_bounds = array<i64: 1>, scalar_prefetch = 0 : i64, scratch_operands = 0 : i64, tpu.core_type = #tpu.core_type<tc>, window_params = [{pipeline_mode = #tpu.pipeline_mode<synchronous>, transform_indices = @transform_0, window_bounds = array<i64: 2, 8, 8, 3>}, {pipeline_mode = #tpu.pipeline_mode<synchronous>, transform_indices = @transform_1, window_bounds = array<i64: 2, 8, 8, 1>}, {pipeline_mode = #tpu.pipeline_mode<synchronous>, transform_indices = @transform_2, window_bounds = array<i64: 4, 16>}, {pipeline_mode = #tpu.pipeline_mode<synchronous>, transform_indices = @transform_3, window_bounds = array<i64: 4, 16>}, {pipeline_mode = #tpu.pipeline_mode<synchronous>, transform_indices = @transform_4, window_bounds = array<i64: 2, 8, 8, 3>}, {pipeline_mode = #tpu.pipeline_mode<synchronous>, transform_indices = @transform_5, window_bounds = array<i64: 2, 8, 8, 1>}, {pipeline_mode = #tpu.pipeline_mode<synchronous>, transform_indices = @transform_6, window_bounds = array<i64: 5, 16>}, {pipeline_mode = #tpu.pipeline_mode<synchronous>, transform_indices = @transform_7, window_bounds = array<i64: 5, 16>}, {pipeline_mode = #tpu.pipeline_mode<synchronous>, transform_indices = @transform_8, window_bounds = array<i64: 2, 16, 1>}, {pipeline_mode = #tpu.pipeline_mode<synchronous>, transform_indices = @transform_9, window_bounds = array<i64: 2, 16, 1>}, {pipeline_mode = #tpu.pipeline_mode<synchronous>, transform_indices = @transform_10, window_bounds = array<i64: 1, 128>}]} {
    %c0 = arith.constant 0 : index
    %c0_0 = arith.constant 0 : index
    %c0_1 = arith.constant 0 : index
    %c0_2 = arith.constant 0 : index
    %0 = vector.load %arg1[%c0, %c0_0, %c0_1, %c0_2] : memref<2x8x8x3xf32, #tpu.memory_space<vmem>>, vector<2x8x8x3xf32>
    %c0_3 = arith.constant 0 : index
    %c0_4 = arith.constant 0 : index
    %c0_5 = arith.constant 0 : index
    %c0_6 = arith.constant 0 : index
    %1 = vector.load %arg2[%c0_3, %c0_4, %c0_5, %c0_6] : memref<2x8x8x1xi32, #tpu.memory_space<vmem>>, vector<2x8x8x1xi32>
    %2 = tpu.iota {dimensions = array<i32: 3>} : vector<2x8x8x3xi32>
    %3 = vector.broadcast %1 : vector<2x8x8x1xi32> to vector<2x8x8x3xi32>
    %4 = arith.cmpi eq, %2, %3 : vector<2x8x8x3xi32>
    %5 = arith.extui %4 : vector<2x8x8x3xi1> to vector<2x8x8x3xi32>
    %6 = arith.sitofp %5 : vector<2x8x8x3xi32> to vector<2x8x8x3xf32>
    %cst = arith.constant dense<0xFF800000> : vector<2x8x3xf32>
    %7 = vector.multi_reduction <maximumf>, %0, %cst [1] : vector<2x8x8x3xf32> to vector<2x8x3xf32>
    %8 = vector.shape_cast %7 : vector<2x8x3xf32> to vector<2x1x8x3xf32>
    %9 = vector.broadcast %8 : vector<2x1x8x3xf32> to vector<2x8x8x3xf32>
    %10 = arith.subf %0, %9 : vector<2x8x8x3xf32>
    %11 = math.exp %10 : vector<2x8x8x3xf32>
    %cst_7 = arith.constant dense<0.000000e+00> : vector<2x8x3xf32>
    %12 = vector.multi_reduction <add>, %11, %cst_7 [1] : vector<2x8x8x3xf32> to vector<2x8x3xf32>
    %13 = vector.shape_cast %12 : vector<2x8x3xf32> to vector<2x1x8x3xf32>
    %14 = math.log %13 : vector<2x1x8x3xf32>
    %15 = vector.broadcast %14 : vector<2x1x8x3xf32> to vector<2x8x8x3xf32>
    %16 = arith.subf %10, %15 : vector<2x8x8x3xf32>
    %17 = tpu.reciprocal %13 {approx = true} : vector<2x1x8x3xf32> -> vector<2x1x8x3xf32>
    %18 = vector.broadcast %17 : vector<2x1x8x3xf32> to vector<2x8x8x3xf32>
    %19 = arith.mulf %11, %18 : vector<2x8x8x3xf32>
    %cst_8 = arith.constant 1.000000e+00 : f32
    %20 = vector.broadcast %cst_8 : f32 to vector<2x8x8x3xf32>
    %21 = arith.subf %20, %19 : vector<2x8x8x3xf32>
    %22 = arith.mulf %21, %21 : vector<2x8x8x3xf32>
    %cst_9 = arith.constant -2.500000e-01 : f32
    %23 = vector.broadcast %cst_9 : f32 to vector<2x8x8x3xf32>
    %24 = arith.mulf %23, %22 : vector<2x8x8x3xf32>
    %25 = arith.mulf %24, %6 : vector<2x8x8x3xf32>
    %26 = arith.mulf %25, %16 : vector<2x8x8x3xf32>
    %27 = vector.shape_cast %26 : vector<2x8x8x3xf32> to vector<1x2x8x8x3xf32>
    %cst_10 = arith.constant dense<0.000000e+00> : vector<1xf32>
    %28 = vector.multi_reduction <add>, %27, %cst_10 [1, 2, 3, 4] : vector<1x2x8x8x3xf32> to vector<1xf32>
    %29 = vector.shape_cast %28 : vector<1xf32> to vector<1x1x1x1x1xf32>
    %30 = vector.extract %29[0, 0, 0, 0, 0] : f32 from vector<1x1x1x1x1xf32>
    %cst_11 = arith.constant 2.500000e-02 : f32
    %31 = arith.mulf %30, %cst_11 : f32
    %c0_12 = arith.constant 0 : index
    %c0_13 = arith.constant 0 : index
    %32 = vector.load %arg3[%c0_12, %c0_13] : memref<4x16xf32, #tpu.memory_space<vmem>>, vector<4x16xf32>
    %c0_14 = arith.constant 0 : index
    %c0_15 = arith.constant 0 : index
    %33 = vector.load %arg4[%c0_14, %c0_15] : memref<4x16xf32, #tpu.memory_space<vmem>>, vector<4x16xf32>
    %34 = arith.subf %32, %33 : vector<4x16xf32>
    %35 = math.absf %34 : vector<4x16xf32>
    %36 = vector.shape_cast %35 : vector<4x16xf32> to vector<1x4x16xf32>
    %cst_16 = arith.constant dense<0.000000e+00> : vector<1xf32>
    %37 = vector.multi_reduction <add>, %36, %cst_16 [1, 2] : vector<1x4x16xf32> to vector<1xf32>
    %38 = vector.shape_cast %37 : vector<1xf32> to vector<1x1x1xf32>
    %39 = vector.extract %38[0, 0, 0] : f32 from vector<1x1x1xf32>
    %cst_17 = arith.constant 2.000000e-01 : f32
    %40 = arith.mulf %39, %cst_17 : f32
    %c0_18 = arith.constant 0 : index
    %c0_19 = arith.constant 0 : index
    %c0_20 = arith.constant 0 : index
    %c0_21 = arith.constant 0 : index
    %41 = vector.load %arg5[%c0_18, %c0_19, %c0_20, %c0_21] : memref<2x8x8x3xf32, #tpu.memory_space<vmem>>, vector<2x8x8x3xf32>
    %c0_22 = arith.constant 0 : index
    %c0_23 = arith.constant 0 : index
    %c0_24 = arith.constant 0 : index
    %c0_25 = arith.constant 0 : index
    %42 = vector.load %arg6[%c0_22, %c0_23, %c0_24, %c0_25] : memref<2x8x8x1xi32, #tpu.memory_space<vmem>>, vector<2x8x8x1xi32>
    %43 = tpu.iota {dimensions = array<i32: 3>} : vector<2x8x8x3xi32>
    %44 = vector.broadcast %42 : vector<2x8x8x1xi32> to vector<2x8x8x3xi32>
    %45 = arith.cmpi eq, %43, %44 : vector<2x8x8x3xi32>
    %46 = arith.extui %45 : vector<2x8x8x3xi1> to vector<2x8x8x3xi32>
    %47 = arith.sitofp %46 : vector<2x8x8x3xi32> to vector<2x8x8x3xf32>
    %cst_26 = arith.constant dense<0xFF800000> : vector<2x8x3xf32>
    %48 = vector.multi_reduction <maximumf>, %41, %cst_26 [1] : vector<2x8x8x3xf32> to vector<2x8x3xf32>
    %49 = vector.shape_cast %48 : vector<2x8x3xf32> to vector<2x1x8x3xf32>
    %50 = vector.broadcast %49 : vector<2x1x8x3xf32> to vector<2x8x8x3xf32>
    %51 = arith.subf %41, %50 : vector<2x8x8x3xf32>
    %52 = math.exp %51 : vector<2x8x8x3xf32>
    %cst_27 = arith.constant dense<0.000000e+00> : vector<2x8x3xf32>
    %53 = vector.multi_reduction <add>, %52, %cst_27 [1] : vector<2x8x8x3xf32> to vector<2x8x3xf32>
    %54 = vector.shape_cast %53 : vector<2x8x3xf32> to vector<2x1x8x3xf32>
    %55 = math.log %54 : vector<2x1x8x3xf32>
    %56 = vector.broadcast %55 : vector<2x1x8x3xf32> to vector<2x8x8x3xf32>
    %57 = arith.subf %51, %56 : vector<2x8x8x3xf32>
    %58 = tpu.reciprocal %54 {approx = true} : vector<2x1x8x3xf32> -> vector<2x1x8x3xf32>
    %59 = vector.broadcast %58 : vector<2x1x8x3xf32> to vector<2x8x8x3xf32>
    %60 = arith.mulf %52, %59 : vector<2x8x8x3xf32>
    %cst_28 = arith.constant 1.000000e+00 : f32
    %61 = vector.broadcast %cst_28 : f32 to vector<2x8x8x3xf32>
    %62 = arith.subf %61, %60 : vector<2x8x8x3xf32>
    %63 = arith.mulf %62, %62 : vector<2x8x8x3xf32>
    %cst_29 = arith.constant -2.500000e-01 : f32
    %64 = vector.broadcast %cst_29 : f32 to vector<2x8x8x3xf32>
    %65 = arith.mulf %64, %63 : vector<2x8x8x3xf32>
    %66 = arith.mulf %65, %47 : vector<2x8x8x3xf32>
    %67 = arith.mulf %66, %57 : vector<2x8x8x3xf32>
    %68 = vector.shape_cast %67 : vector<2x8x8x3xf32> to vector<1x2x8x8x3xf32>
    %cst_30 = arith.constant dense<0.000000e+00> : vector<1xf32>
    %69 = vector.multi_reduction <add>, %68, %cst_30 [1, 2, 3, 4] : vector<1x2x8x8x3xf32> to vector<1xf32>
    %70 = vector.shape_cast %69 : vector<1xf32> to vector<1x1x1x1x1xf32>
    %71 = vector.extract %70[0, 0, 0, 0, 0] : f32 from vector<1x1x1x1x1xf32>
    %cst_31 = arith.constant 2.500000e-02 : f32
    %72 = arith.mulf %71, %cst_31 : f32
    %c0_32 = arith.constant 0 : index
    %c0_33 = arith.constant 0 : index
    %73 = vector.load %arg7[%c0_32, %c0_33] : memref<5x16xf32, #tpu.memory_space<vmem>>, vector<5x16xf32>
    %c0_34 = arith.constant 0 : index
    %c0_35 = arith.constant 0 : index
    %74 = vector.load %arg8[%c0_34, %c0_35] : memref<5x16xf32, #tpu.memory_space<vmem>>, vector<5x16xf32>
    %75 = arith.subf %73, %74 : vector<5x16xf32>
    %76 = math.absf %75 : vector<5x16xf32>
    %77 = vector.shape_cast %76 : vector<5x16xf32> to vector<1x5x16xf32>
    %cst_36 = arith.constant dense<0.000000e+00> : vector<1xf32>
    %78 = vector.multi_reduction <add>, %77, %cst_36 [1, 2] : vector<1x5x16xf32> to vector<1xf32>
    %79 = vector.shape_cast %78 : vector<1xf32> to vector<1x1x1xf32>
    %80 = vector.extract %79[0, 0, 0] : f32 from vector<1x1x1xf32>
    %cst_37 = arith.constant 2.000000e-01 : f32
    %81 = arith.mulf %80, %cst_37 : f32
    %c0_38 = arith.constant 0 : index
    %c0_39 = arith.constant 0 : index
    %c0_40 = arith.constant 0 : index
    %82 = vector.load %arg9[%c0_38, %c0_39, %c0_40] : memref<2x16x1xf32, #tpu.memory_space<vmem>>, vector<2x16x1xf32>
    %c0_41 = arith.constant 0 : index
    %c0_42 = arith.constant 0 : index
    %c0_43 = arith.constant 0 : index
    %83 = vector.load %arg10[%c0_41, %c0_42, %c0_43] : memref<2x16x1xi32, #tpu.memory_space<vmem>>, vector<2x16x1xi32>
    %84 = tpu.iota {dimensions = array<i32: 2>} : vector<2x16x1xi32>
    %85 = arith.cmpi eq, %84, %83 : vector<2x16x1xi32>
    %86 = arith.extui %85 : vector<2x16x1xi1> to vector<2x16x1xi32>
    %87 = arith.sitofp %86 : vector<2x16x1xi32> to vector<2x16x1xf32>
    %88 = math.absf %82 : vector<2x16x1xf32>
    %cst_44 = arith.constant 0.000000e+00 : f32
    %89 = vector.broadcast %cst_44 : f32 to vector<2x16x1xf32>
    %90 = arith.subf %89, %88 : vector<2x16x1xf32>
    %91 = math.exp %90 : vector<2x16x1xf32>
    %cst_45 = arith.constant 1.000000e+00 : f32
    %92 = vector.broadcast %cst_45 : f32 to vector<2x16x1xf32>
    %93 = arith.addf %92, %91 : vector<2x16x1xf32>
    %94 = tpu.reciprocal %93 {approx = true} : vector<2x16x1xf32> -> vector<2x16x1xf32>
    %cst_46 = arith.constant 0.000000e+00 : f32
    %95 = vector.broadcast %cst_46 : f32 to vector<2x16x1xf32>
    %96 = arith.cmpf oge, %82, %95 : vector<2x16x1xf32>
    %97 = arith.mulf %91, %94 : vector<2x16x1xf32>
    %98 = arith.select %96, %94, %97 : vector<2x16x1xi1>, vector<2x16x1xf32>
    %cst_47 = arith.constant 0.000000e+00 : f32
    %99 = vector.broadcast %cst_47 : f32 to vector<2x16x1xf32>
    %100 = arith.maximumf %82, %99 : vector<2x16x1xf32>
    %101 = arith.mulf %82, %87 : vector<2x16x1xf32>
    %102 = arith.subf %100, %101 : vector<2x16x1xf32>
    %cst_48 = arith.constant 1.000000e+00 : f32
    %103 = vector.broadcast %cst_48 : f32 to vector<2x16x1xf32>
    %104 = arith.addf %103, %91 : vector<2x16x1xf32>
    %105 = math.log %104 : vector<2x16x1xf32>
    %106 = arith.addf %102, %105 : vector<2x16x1xf32>
    %107 = arith.mulf %98, %87 : vector<2x16x1xf32>
    %cst_49 = arith.constant 1.000000e+00 : f32
    %108 = vector.broadcast %cst_49 : f32 to vector<2x16x1xf32>
    %109 = arith.subf %108, %98 : vector<2x16x1xf32>
    %cst_50 = arith.constant 1.000000e+00 : f32
    %110 = vector.broadcast %cst_50 : f32 to vector<2x16x1xf32>
    %111 = arith.subf %110, %87 : vector<2x16x1xf32>
    %112 = arith.mulf %109, %111 : vector<2x16x1xf32>
    %113 = arith.addf %107, %112 : vector<2x16x1xf32>
    %cst_51 = arith.constant 1.000000e+00 : f32
    %114 = vector.broadcast %cst_51 : f32 to vector<2x16x1xf32>
    %115 = arith.subf %114, %113 : vector<2x16x1xf32>
    %116 = arith.mulf %115, %115 : vector<2x16x1xf32>
    %117 = arith.mulf %106, %116 : vector<2x16x1xf32>
    %cst_52 = arith.constant 2.500000e-01 : f32
    %118 = vector.broadcast %cst_52 : f32 to vector<2x16x1xf32>
    %119 = arith.mulf %118, %87 : vector<2x16x1xf32>
    %cst_53 = arith.constant 1.000000e+00 : f32
    %120 = vector.broadcast %cst_53 : f32 to vector<2x16x1xf32>
    %121 = arith.subf %120, %87 : vector<2x16x1xf32>
    %cst_54 = arith.constant 7.500000e-01 : f32
    %122 = vector.broadcast %cst_54 : f32 to vector<2x16x1xf32>
    %123 = arith.mulf %122, %121 : vector<2x16x1xf32>
    %124 = arith.addf %119, %123 : vector<2x16x1xf32>
    %125 = arith.mulf %124, %117 : vector<2x16x1xf32>
    %126 = vector.shape_cast %125 : vector<2x16x1xf32> to vector<1x2x16x1xf32>
    %cst_55 = arith.constant dense<0.000000e+00> : vector<1xf32>
    %127 = vector.multi_reduction <add>, %126, %cst_55 [1, 2, 3] : vector<1x2x16x1xf32> to vector<1xf32>
    %128 = vector.shape_cast %127 : vector<1xf32> to vector<1x1x1x1xf32>
    %129 = vector.extract %128[0, 0, 0, 0] : f32 from vector<1x1x1x1xf32>
    %cst_56 = arith.constant 2.000000e-01 : f32
    %130 = arith.mulf %129, %cst_56 : f32
    %131 = tpu.iota {dimensions = array<i32: 1>} : vector<1x128xi32>
    %cst_57 = arith.constant 0.000000e+00 : f32
    %132 = vector.broadcast %cst_57 : f32 to vector<1x128xf32>
    %c0_i32 = arith.constant 0 : i32
    %133 = vector.broadcast %c0_i32 : i32 to vector<1x128xi32>
    %134 = arith.cmpi eq, %131, %133 : vector<1x128xi32>
    %cst_58 = arith.constant 0.000000e+00 : f32
    %135 = vector.broadcast %31 : f32 to vector<1x128xf32>
    %136 = vector.broadcast %cst_58 : f32 to vector<1x128xf32>
    %137 = arith.select %134, %135, %136 : vector<1x128xi1>, vector<1x128xf32>
    %138 = arith.addf %132, %137 : vector<1x128xf32>
    %c1_i32 = arith.constant 1 : i32
    %139 = vector.broadcast %c1_i32 : i32 to vector<1x128xi32>
    %140 = arith.cmpi eq, %131, %139 : vector<1x128xi32>
    %cst_59 = arith.constant 0.000000e+00 : f32
    %141 = vector.broadcast %40 : f32 to vector<1x128xf32>
    %142 = vector.broadcast %cst_59 : f32 to vector<1x128xf32>
    %143 = arith.select %140, %141, %142 : vector<1x128xi1>, vector<1x128xf32>
    %144 = arith.addf %138, %143 : vector<1x128xf32>
    %c2_i32 = arith.constant 2 : i32
    %145 = vector.broadcast %c2_i32 : i32 to vector<1x128xi32>
    %146 = arith.cmpi eq, %131, %145 : vector<1x128xi32>
    %cst_60 = arith.constant 0.000000e+00 : f32
    %147 = vector.broadcast %72 : f32 to vector<1x128xf32>
    %148 = vector.broadcast %cst_60 : f32 to vector<1x128xf32>
    %149 = arith.select %146, %147, %148 : vector<1x128xi1>, vector<1x128xf32>
    %150 = arith.addf %144, %149 : vector<1x128xf32>
    %c3_i32 = arith.constant 3 : i32
    %151 = vector.broadcast %c3_i32 : i32 to vector<1x128xi32>
    %152 = arith.cmpi eq, %131, %151 : vector<1x128xi32>
    %cst_61 = arith.constant 0.000000e+00 : f32
    %153 = vector.broadcast %81 : f32 to vector<1x128xf32>
    %154 = vector.broadcast %cst_61 : f32 to vector<1x128xf32>
    %155 = arith.select %152, %153, %154 : vector<1x128xi1>, vector<1x128xf32>
    %156 = arith.addf %150, %155 : vector<1x128xf32>
    %c4_i32 = arith.constant 4 : i32
    %157 = vector.broadcast %c4_i32 : i32 to vector<1x128xi32>
    %158 = arith.cmpi eq, %131, %157 : vector<1x128xi32>
    %cst_62 = arith.constant 0.000000e+00 : f32
    %159 = vector.broadcast %130 : f32 to vector<1x128xf32>
    %160 = vector.broadcast %cst_62 : f32 to vector<1x128xf32>
    %161 = arith.select %158, %159, %160 : vector<1x128xi1>, vector<1x128xf32>
    %162 = arith.addf %156, %161 : vector<1x128xf32>
    %c0_63 = arith.constant 0 : index
    %c0_64 = arith.constant 0 : index
    %163 = vector.load %arg11[%c0_63, %c0_64] : memref<1x128xf32, #tpu.memory_space<vmem>>, vector<1x128xf32>
    tpu.vector_store %arg11[%c0_63, %c0_64], %162 {strides = array<i32>} : memref<1x128xf32, #tpu.memory_space<vmem>>, vector<1x128xf32>,
    return
  }
  func.func @transform_0(%arg0: i32) -> (i32, i32, i32, i32) {
    %c0_i32 = arith.constant 0 : i32
    %c0_i32_0 = arith.constant 0 : i32
    %c0_i32_1 = arith.constant 0 : i32
    %c0_i32_2 = arith.constant 0 : i32
    %c0_i32_3 = arith.constant 0 : i32
    return %c0_i32, %c0_i32_0, %c0_i32_1, %c0_i32_2 : i32, i32, i32, i32
  }
  func.func @transform_1(%arg0: i32) -> (i32, i32, i32, i32) {
    %c0_i32 = arith.constant 0 : i32
    %c0_i32_0 = arith.constant 0 : i32
    %c0_i32_1 = arith.constant 0 : i32
    %c0_i32_2 = arith.constant 0 : i32
    %c0_i32_3 = arith.constant 0 : i32
    return %c0_i32, %c0_i32_0, %c0_i32_1, %c0_i32_2 : i32, i32, i32, i32
  }
  func.func @transform_2(%arg0: i32) -> (i32, i32) {
    %c0_i32 = arith.constant 0 : i32
    %c0_i32_0 = arith.constant 0 : i32
    %c0_i32_1 = arith.constant 0 : i32
    return %c0_i32, %c0_i32_0 : i32, i32
  }
  func.func @transform_3(%arg0: i32) -> (i32, i32) {
    %c0_i32 = arith.constant 0 : i32
    %c0_i32_0 = arith.constant 0 : i32
    %c0_i32_1 = arith.constant 0 : i32
    return %c0_i32, %c0_i32_0 : i32, i32
  }
  func.func @transform_4(%arg0: i32) -> (i32, i32, i32, i32) {
    %c0_i32 = arith.constant 0 : i32
    %c0_i32_0 = arith.constant 0 : i32
    %c0_i32_1 = arith.constant 0 : i32
    %c0_i32_2 = arith.constant 0 : i32
    %c0_i32_3 = arith.constant 0 : i32
    return %c0_i32, %c0_i32_0, %c0_i32_1, %c0_i32_2 : i32, i32, i32, i32
  }
  func.func @transform_5(%arg0: i32) -> (i32, i32, i32, i32) {
    %c0_i32 = arith.constant 0 : i32
    %c0_i32_0 = arith.constant 0 : i32
    %c0_i32_1 = arith.constant 0 : i32
    %c0_i32_2 = arith.constant 0 : i32
    %c0_i32_3 = arith.constant 0 : i32
    return %c0_i32, %c0_i32_0, %c0_i32_1, %c0_i32_2 : i32, i32, i32, i32
  }
  func.func @transform_6(%arg0: i32) -> (i32, i32) {
    %c0_i32 = arith.constant 0 : i32
    %c0_i32_0 = arith.constant 0 : i32
    %c0_i32_1 = arith.constant 0 : i32
    return %c0_i32, %c0_i32_0 : i32, i32
  }
  func.func @transform_7(%arg0: i32) -> (i32, i32) {
    %c0_i32 = arith.constant 0 : i32
    %c0_i32_0 = arith.constant 0 : i32
    %c0_i32_1 = arith.constant 0 : i32
    return %c0_i32, %c0_i32_0 : i32, i32
  }
  func.func @transform_8(%arg0: i32) -> (i32, i32, i32) {
    %c0_i32 = arith.constant 0 : i32
    %c0_i32_0 = arith.constant 0 : i32
    %c0_i32_1 = arith.constant 0 : i32
    %c0_i32_2 = arith.constant 0 : i32
    return %c0_i32, %c0_i32_0, %c0_i32_1 : i32, i32, i32
  }
  func.func @transform_9(%arg0: i32) -> (i32, i32, i32) {
    %c0_i32 = arith.constant 0 : i32
    %c0_i32_0 = arith.constant 0 : i32
    %c0_i32_1 = arith.constant 0 : i32
    %c0_i32_2 = arith.constant 0 : i32
    return %c0_i32, %c0_i32_0, %c0_i32_1 : i32, i32, i32
  }
  func.func @transform_10(%arg0: i32) -> (i32, i32) {
    %c0_i32 = arith.constant 0 : i32
    %c0_i32_0 = arith.constant 0 : i32
    %c0_i32_1 = arith.constant 0 : i32
    return %c0_i32, %c0_i32_0 : i32, i32
  }
}

</mosaic_0001>

<llo_original>
// kernel: tpu_custom_call.1
$region0: #{tpu_custom_call.1}
  #allocation0 [shape = 'u32[]', space=smem, size = 0x4, offset = 0x4, fixed_abs, tag = 'smem constant byte address 0x4 - core index']
  #allocation1 [shape = 'u32[144,128]{1,0:T(1,128)}', space=vmem, size = 0x12000, scoped, tag = 'internal scratch']
  %s0 = inlined_call_operand.vmem [shape: f32[2,8,8,3], index: 0, kind: input, shape index: {}]
  %s1 = inlined_call_operand.vmem [shape: s32[2,8,8,1], index: 1, kind: input, shape index: {}]
  %s2 = inlined_call_operand.vmem [shape: f32[4,16], index: 2, kind: input, shape index: {}]
  %s3 = inlined_call_operand.vmem [shape: f32[4,16], index: 3, kind: input, shape index: {}]
  %s4 = inlined_call_operand.vmem [shape: f32[2,8,8,3], index: 4, kind: input, shape index: {}]
  %s5 = inlined_call_operand.vmem [shape: s32[2,8,8,1], index: 5, kind: input, shape index: {}]
  %s6 = inlined_call_operand.vmem [shape: f32[5,16], index: 6, kind: input, shape index: {}]
  %s7 = inlined_call_operand.vmem [shape: f32[5,16], index: 7, kind: input, shape index: {}]
  %s8 = inlined_call_operand.vmem [shape: f32[2,16,1], index: 8, kind: input, shape index: {}]
  %s9 = inlined_call_operand.vmem [shape: s32[2,16,1], index: 9, kind: input, shape index: {}]
  %s10 = inlined_call_operand.hbm [shape: f32[1,128], index: 10, kind: output, shape index: {}]
  %s11 = sld [smem:[#allocation0]]
  $region50: #{tpu_custom_call.1} parent=0
    _
  %s13 = ssub.s32 1, %s11
  %s14 = scalar_select 0, %s13, %s11
  $region1: #{tpu_custom_call.1} parent=0
    #allocation2 [shape = 'u8[512]{0}', space=vmem, size = 0x400, scoped, tag = 'output window, operand 0, single buffered']
    #allocation3 [shape = 's32[1]{0}', space=sflag, size = 0x4, scoped, tag = 'scoped memory for tpu_custom_call.1']
    %15 = vsyncpa [#allocation3], 0
    // Predicated region
    $region2: #{tpu_custom_call.1} parent=1 // pred_check
      _
    $region3: #{tpu_custom_call.1} parent=1 // pred_check_branch
      %17 = sbr.rel (0) target = $region5
    $region4: #{tpu_custom_call.1} parent=1 // pred_region
      _
    $region5: #{tpu_custom_call.1} parent=1 // pred_fallthru
      _
    // Predicated region
    $region6: #{tpu_custom_call.1} parent=1 // pred_check
      _
    $region7: #{tpu_custom_call.1} parent=1 // pred_check_branch
      %19 = sbr.rel (0) target = $region9
    $region8: #{tpu_custom_call.1} parent=1 // pred_region
      _
    $region9: #{tpu_custom_call.1} parent=1 // pred_fallthru
      _
    // Predicated region
    $region10: #{tpu_custom_call.1} parent=1 // pred_check
      _
    $region11: #{tpu_custom_call.1} parent=1 // pred_check_branch
      %21 = sbr.rel (0) target = $region13
    $region12: #{tpu_custom_call.1} parent=1 // pred_region
      _
    $region13: #{tpu_custom_call.1} parent=1 // pred_fallthru
      _
    // Predicated region
    $region14: #{tpu_custom_call.1} parent=1 // pred_check
      _
    $region15: #{tpu_custom_call.1} parent=1 // pred_check_branch
      %23 = sbr.rel (0) target = $region17
    $region16: #{tpu_custom_call.1} parent=1 // pred_region
      _
    $region17: #{tpu_custom_call.1} parent=1 // pred_fallthru
      _
    // Predicated region
    $region18: #{tpu_custom_call.1} parent=1 // pred_check
      _
    $region19: #{tpu_custom_call.1} parent=1 // pred_check_branch
      %25 = sbr.rel (0) target = $region21
    $region20: #{tpu_custom_call.1} parent=1 // pred_region
      _
    $region21: #{tpu_custom_call.1} parent=1 // pred_fallthru
      _
    // Predicated region
    $region22: #{tpu_custom_call.1} parent=1 // pred_check
      _
    $region23: #{tpu_custom_call.1} parent=1 // pred_check_branch
      %27 = sbr.rel (0) target = $region25
    $region24: #{tpu_custom_call.1} parent=1 // pred_region
      _
    $region25: #{tpu_custom_call.1} parent=1 // pred_fallthru
      _
    // Predicated region
    $region26: #{tpu_custom_call.1} parent=1 // pred_check
      _
    $region27: #{tpu_custom_call.1} parent=1 // pred_check_branch
      %29 = sbr.rel (0) target = $region29
    $region28: #{tpu_custom_call.1} parent=1 // pred_region
      _
    $region29: #{tpu_custom_call.1} parent=1 // pred_fallthru
      _
    // Predicated region
    $region30: #{tpu_custom_call.1} parent=1 // pred_check
      _
    $region31: #{tpu_custom_call.1} parent=1 // pred_check_branch
      %31 = sbr.rel (0) target = $region33
    $region32: #{tpu_custom_call.1} parent=1 // pred_region
      _
    $region33: #{tpu_custom_call.1} parent=1 // pred_fallthru
      _
    // Predicated region
    $region34: #{tpu_custom_call.1} parent=1 // pred_check
      _
    $region35: #{tpu_custom_call.1} parent=1 // pred_check_branch
      %33 = sbr.rel (0) target = $region37
    $region36: #{tpu_custom_call.1} parent=1 // pred_region
      _
    $region37: #{tpu_custom_call.1} parent=1 // pred_fallthru
      _
    // Predicated region
    $region38: #{tpu_custom_call.1} parent=1 // pred_check
      _
    $region39: #{tpu_custom_call.1} parent=1 // pred_check_branch
      %35 = sbr.rel (0) target = $region41
    $region40: #{tpu_custom_call.1} parent=1 // pred_region
      _
    $region41: #{tpu_custom_call.1} parent=1 // pred_fallthru
      _
    %v36 = vld [vmem:[%s0] sm:$0xff]
    %v37 = vld [vmem:[%s0 + $0x8] sm:$0xff]
    %v38 = vld [vmem:[%s0 + $0x10] sm:$0xff]
    %v39 = vld [vmem:[%s0 + $0x18] sm:$0xff]
    %v40 = vld [vmem:[%s0 + $0x20] sm:$0xff]
    %v41 = vld [vmem:[%s0 + $0x28] sm:$0xff]
    %v42 = vld [vmem:[%s0 + $0x30] sm:$0xff]
    %v43 = vld [vmem:[%s0 + $0x38] sm:$0xff]
    %v44 = vld [vmem:[%s0 + $0x40] sm:$0xff]
    %v45 = vld [vmem:[%s0 + $0x48] sm:$0xff]
    %v46 = vld [vmem:[%s0 + $0x50] sm:$0xff]
    %v47 = vld [vmem:[%s0 + $0x58] sm:$0xff]
    %v48 = vld [vmem:[%s0 + $0x60] sm:$0xff]
    %v49 = vld [vmem:[%s0 + $0x68] sm:$0xff]
    %v50 = vld [vmem:[%s0 + $0x70] sm:$0xff]
    %v51 = vld [vmem:[%s0 + $0x78] sm:$0xff]
    %v52 = vld [vmem:[%s1] sm:$0xff]
    %v53 = vld [vmem:[%s1 + $0x8] sm:$0xff]
    %v54 = vld [vmem:[%s1 + $0x10] sm:$0xff]
    %v55 = vld [vmem:[%s1 + $0x18] sm:$0xff]
    %v56 = vld [vmem:[%s1 + $0x20] sm:$0xff]
    %v57 = vld [vmem:[%s1 + $0x28] sm:$0xff]
    %v58 = vld [vmem:[%s1 + $0x30] sm:$0xff]
    %v59 = vld [vmem:[%s1 + $0x38] sm:$0xff]
    %v60 = vld [vmem:[%s1 + $0x40] sm:$0xff]
    %v61 = vld [vmem:[%s1 + $0x48] sm:$0xff]
    %v62 = vld [vmem:[%s1 + $0x50] sm:$0xff]
    %v63 = vld [vmem:[%s1 + $0x58] sm:$0xff]
    %v64 = vld [vmem:[%s1 + $0x60] sm:$0xff]
    %v65 = vld [vmem:[%s1 + $0x68] sm:$0xff]
    %v66 = vld [vmem:[%s1 + $0x70] sm:$0xff]
    %v67 = vld [vmem:[%s1 + $0x78] sm:$0xff]
    %v68 = vlaneseq
    %v69 = vand.u32 %v68, 127
    %70 = vset.pattern.permute.xlu0 0
    %71 = vperm.xlu0 %70, %v52
    %v72 = vpop.permute.xlu0 %71
    %73 = vset.pattern.permute.xlu0 0
    %74 = vperm.xlu0 %73, %v53
    %v75 = vpop.permute.xlu0 %74
    %76 = vset.pattern.permute.xlu0 0
    %77 = vperm.xlu0 %76, %v54
    %v78 = vpop.permute.xlu0 %77
    %79 = vset.pattern.permute.xlu0 0
    %80 = vperm.xlu0 %79, %v55
    %v81 = vpop.permute.xlu0 %80
    %82 = vset.pattern.permute.xlu0 0
    %83 = vperm.xlu0 %82, %v56
    %v84 = vpop.permute.xlu0 %83
    %85 = vset.pattern.permute.xlu0 0
    %86 = vperm.xlu0 %85, %v57
    %v87 = vpop.permute.xlu0 %86
    %88 = vset.pattern.permute.xlu0 0
    %89 = vperm.xlu0 %88, %v58
    %v90 = vpop.permute.xlu0 %89
    %91 = vset.pattern.permute.xlu0 0
    %92 = vperm.xlu0 %91, %v59
    %v93 = vpop.permute.xlu0 %92
    %94 = vset.pattern.permute.xlu0 0
    %95 = vperm.xlu0 %94, %v60
    %v96 = vpop.permute.xlu0 %95
    %97 = vset.pattern.permute.xlu0 0
    %98 = vperm.xlu0 %97, %v61
    %v99 = vpop.permute.xlu0 %98
    %100 = vset.pattern.permute.xlu0 0
    %101 = vperm.xlu0 %100, %v62
    %v102 = vpop.permute.xlu0 %101
    %103 = vset.pattern.permute.xlu0 0
    %104 = vperm.xlu0 %103, %v63
    %v105 = vpop.permute.xlu0 %104
    %106 = vset.pattern.permute.xlu0 0
    %107 = vperm.xlu0 %106, %v64
    %v108 = vpop.permute.xlu0 %107
    %109 = vset.pattern.permute.xlu0 0
    %110 = vperm.xlu0 %109, %v65
    %v111 = vpop.permute.xlu0 %110
    %112 = vset.pattern.permute.xlu0 0
    %113 = vperm.xlu0 %112, %v66
    %v114 = vpop.permute.xlu0 %113
    %115 = vset.pattern.permute.xlu0 0
    %116 = vperm.xlu0 %115, %v67
    %v117 = vpop.permute.xlu0 %116
    %vm118 = vcmp.eq.s32.totalorder %v69, %v72
    %vm119 = vcmp.eq.s32.totalorder %v69, %v75
    %vm120 = vcmp.eq.s32.totalorder %v69, %v78
    %vm121 = vcmp.eq.s32.totalorder %v69, %v81
    %vm122 = vcmp.eq.s32.totalorder %v69, %v84
    %vm123 = vcmp.eq.s32.totalorder %v69, %v87
    %vm124 = vcmp.eq.s32.totalorder %v69, %v90
    %vm125 = vcmp.eq.s32.totalorder %v69, %v93
    %vm126 = vcmp.eq.s32.totalorder %v69, %v96
    %vm127 = vcmp.eq.s32.totalorder %v69, %v99
    %vm128 = vcmp.eq.s32.totalorder %v69, %v102
    %vm129 = vcmp.eq.s32.totalorder %v69, %v105
    %vm130 = vcmp.eq.s32.totalorder %v69, %v108
    %vm131 = vcmp.eq.s32.totalorder %v69, %v111
    %vm132 = vcmp.eq.s32.totalorder %v69, %v114
    %vm133 = vcmp.eq.s32.totalorder %v69, %v117
    %v134 = vsel %vm118, 1, 0
    %v135 = vsel %vm119, 1, 0
    %v136 = vsel %vm120, 1, 0
    %v137 = vsel %vm121, 1, 0
    %v138 = vsel %vm122, 1, 0
    %v139 = vsel %vm123, 1, 0
    %v140 = vsel %vm124, 1, 0
    %v141 = vsel %vm125, 1, 0
    %v142 = vsel %vm126, 1, 0
    %v143 = vsel %vm127, 1, 0
    %v144 = vsel %vm128, 1, 0
    %v145 = vsel %vm129, 1, 0
    %v146 = vsel %vm130, 1, 0
    %v147 = vsel %vm131, 1, 0
    %v148 = vsel %vm132, 1, 0
    %v149 = vsel %vm133, 1, 0
    %v150 = vcvt.s32.f32 %v134
    %v151 = vcvt.s32.f32 %v135
    %v152 = vcvt.s32.f32 %v136
    %v153 = vcvt.s32.f32 %v137
    %v154 = vcvt.s32.f32 %v138
    %v155 = vcvt.s32.f32 %v139
    %v156 = vcvt.s32.f32 %v140
    %v157 = vcvt.s32.f32 %v141
    %v158 = vcvt.s32.f32 %v142
    %v159 = vcvt.s32.f32 %v143
    %v160 = vcvt.s32.f32 %v144
    %v161 = vcvt.s32.f32 %v145
    %v162 = vcvt.s32.f32 %v146
    %v163 = vcvt.s32.f32 %v147
    %v164 = vcvt.s32.f32 %v148
    %v165 = vcvt.s32.f32 %v149
    %vm166 = vcmask 23552
    %v167 = vsel %vm166, %v36, -inf
    %v168 = vsel %vm166, %v37, -inf
    %v169 = vsel %vm166, %v38, -inf
    %v170 = vmax.f32 %v167, %v169
    %v171 = vsel %vm166, %v39, -inf
    %v172 = vmax.f32 %v168, %v171
    %v173 = vsel %vm166, %v40, -inf
    %v174 = vmax.f32 %v170, %v173
    %v175 = vsel %vm166, %v41, -inf
    %v176 = vmax.f32 %v172, %v175
    %v177 = vsel %vm166, %v42, -inf
    %v178 = vmax.f32 %v174, %v177
    %v179 = vsel %vm166, %v43, -inf
    %v180 = vmax.f32 %v176, %v179
    %v181 = vmax.f32 %v178, %v180
    %v182 = vsel %vm166, %v44, -inf
    %v183 = vsel %vm166, %v45, -inf
    %v184 = vsel %vm166, %v46, -inf
    %v185 = vmax.f32 %v182, %v184
    %v186 = vsel %vm166, %v47, -inf
    %v187 = vmax.f32 %v183, %v186
    %v188 = vsel %vm166, %v48, -inf
    %v189 = vmax.f32 %v185, %v188
    %v190 = vsel %vm166, %v49, -inf
    %v191 = vmax.f32 %v187, %v190
    %v192 = vsel %vm166, %v50, -inf
    %v193 = vmax.f32 %v189, %v192
    %v194 = vsel %vm166, %v51, -inf
    %v195 = vmax.f32 %v191, %v194
    %v196 = vmax.f32 %v193, %v195
    %v197 = vsub.f32 %v36, %v181
    %v198 = vsub.f32 %v37, %v181
    %v199 = vsub.f32 %v38, %v181
    %v200 = vsub.f32 %v39, %v181
    %v201 = vsub.f32 %v40, %v181
    %v202 = vsub.f32 %v41, %v181
    %v203 = vsub.f32 %v42, %v181
    %v204 = vsub.f32 %v43, %v181
    %v205 = vsub.f32 %v44, %v196
    %v206 = vsub.f32 %v45, %v196
    %v207 = vsub.f32 %v46, %v196
    %v208 = vsub.f32 %v47, %v196
    %v209 = vsub.f32 %v48, %v196
    %v210 = vsub.f32 %v49, %v196
    %v211 = vsub.f32 %v50, %v196
    %v212 = vsub.f32 %v51, %v196
    %v213 = vmul.f32 %v197, 1.442695
    %v214 = vpow.pop %v213
    %v215 = vmul.f32 %v198, 1.442695
    %v216 = vpow.pop %v215
    %v217 = vmul.f32 %v199, 1.442695
    %v218 = vpow.pop %v217
    %v219 = vmul.f32 %v200, 1.442695
    %v220 = vpow.pop %v219
    %v221 = vmul.f32 %v201, 1.442695
    %v222 = vpow.pop %v221
    %v223 = vmul.f32 %v202, 1.442695
    %v224 = vpow.pop %v223
    %v225 = vmul.f32 %v203, 1.442695
    %v226 = vpow.pop %v225
    %v227 = vmul.f32 %v204, 1.442695
    %v228 = vpow.pop %v227
    %v229 = vmul.f32 %v205, 1.442695
    %v230 = vpow.pop %v229
    %v231 = vmul.f32 %v206, 1.442695
    %v232 = vpow.pop %v231
    %v233 = vmul.f32 %v207, 1.442695
    %v234 = vpow.pop %v233
    %v235 = vmul.f32 %v208, 1.442695
    %v236 = vpow.pop %v235
    %v237 = vmul.f32 %v209, 1.442695
    %v238 = vpow.pop %v237
    %v239 = vmul.f32 %v210, 1.442695
    %v240 = vpow.pop %v239
    %v241 = vmul.f32 %v211, 1.442695
    %v242 = vpow.pop %v241
    %v243 = vmul.f32 %v212, 1.442695
    %v244 = vpow.pop %v243
    %v245 = vsel %vm166, %v214, 0.0
    %v246 = vsel %vm166, %v216, 0.0
    %v247 = vadd.f32 %v245, %v246
    %v248 = vsel %vm166, %v218, 0.0
    %v249 = vadd.f32 %v247, %v248
    %v250 = vsel %vm166, %v220, 0.0
    %v251 = vadd.f32 %v249, %v250
    %v252 = vsel %vm166, %v222, 0.0
    %v253 = vadd.f32 %v251, %v252
    %v254 = vsel %vm166, %v224, 0.0
    %v255 = vadd.f32 %v253, %v254
    %v256 = vsel %vm166, %v226, 0.0
    %v257 = vadd.f32 %v255, %v256
    %v258 = vsel %vm166, %v228, 0.0
    %v259 = vadd.f32 %v257, %v258
    %v260 = vsel %vm166, %v230, 0.0
    %v261 = vsel %vm166, %v232, 0.0
    %v262 = vadd.f32 %v260, %v261
    %v263 = vsel %vm166, %v234, 0.0
    %v264 = vadd.f32 %v262, %v263
    %v265 = vsel %vm166, %v236, 0.0
    %v266 = vadd.f32 %v264, %v265
    %v267 = vsel %vm166, %v238, 0.0
    %v268 = vadd.f32 %v266, %v267
    %v269 = vsel %vm166, %v240, 0.0
    %v270 = vadd.f32 %v268, %v269
    %v271 = vsel %vm166, %v242, 0.0
    %v272 = vadd.f32 %v270, %v271
    %v273 = vsel %vm166, %v244, 0.0
    %v274 = vadd.f32 %v272, %v273
    %v275 = vlog2.pop %v259
    %v276 = vmul.f32 %v275, 0.6931472
    %v277 = vlog2.pop %v274
    %v278 = vmul.f32 %v277, 0.6931472
    %v279 = vsub.f32 %v197, %v276
    %v280 = vsub.f32 %v198, %v276
    %v281 = vsub.f32 %v199, %v276
    %v282 = vsub.f32 %v200, %v276
    %v283 = vsub.f32 %v201, %v276
    %v284 = vsub.f32 %v202, %v276
    %v285 = vsub.f32 %v203, %v276
    %v286 = vsub.f32 %v204, %v276
    %v287 = vsub.f32 %v205, %v278
    %v288 = vsub.f32 %v206, %v278
    %v289 = vsub.f32 %v207, %v278
    %v290 = vsub.f32 %v208, %v278
    %v291 = vsub.f32 %v209, %v278
    %v292 = vsub.f32 %v210, %v278
    %v293 = vsub.f32 %v211, %v278
    %v294 = vsub.f32 %v212, %v278
    %v295 = vrcp.pop %v259
    %v296 = vrcp.pop %v274
    %v297 = vmul.f32 %v214, %v295
    %v298 = vmul.f32 %v216, %v295
    %v299 = vmul.f32 %v218, %v295
    %v300 = vmul.f32 %v220, %v295
    %v301 = vmul.f32 %v222, %v295
    %v302 = vmul.f32 %v224, %v295
    %v303 = vmul.f32 %v226, %v295
    %v304 = vmul.f32 %v228, %v295
    %v305 = vmul.f32 %v230, %v296
    %v306 = vmul.f32 %v232, %v296
    %v307 = vmul.f32 %v234, %v296
    %v308 = vmul.f32 %v236, %v296
    %v309 = vmul.f32 %v238, %v296
    %v310 = vmul.f32 %v240, %v296
    %v311 = vmul.f32 %v242, %v296
    %v312 = vmul.f32 %v244, %v296
    %v313 = vsub.f32 1.0, %v297
    %v314 = vsub.f32 1.0, %v298
    %v315 = vsub.f32 1.0, %v299
    %v316 = vsub.f32 1.0, %v300
    %v317 = vsub.f32 1.0, %v301
    %v318 = vsub.f32 1.0, %v302
    %v319 = vsub.f32 1.0, %v303
    %v320 = vsub.f32 1.0, %v304
    %v321 = vsub.f32 1.0, %v305
    %v322 = vsub.f32 1.0, %v306
    %v323 = vsub.f32 1.0, %v307
    %v324 = vsub.f32 1.0, %v308
    %v325 = vsub.f32 1.0, %v309
    %v326 = vsub.f32 1.0, %v310
    %v327 = vsub.f32 1.0, %v311
    %v328 = vsub.f32 1.0, %v312
    %v329 = vmul.f32 %v313, %v313
    %v330 = vmul.f32 %v314, %v314
    %v331 = vmul.f32 %v315, %v315
    %v332 = vmul.f32 %v316, %v316
    %v333 = vmul.f32 %v317, %v317
    %v334 = vmul.f32 %v318, %v318
    %v335 = vmul.f32 %v319, %v319
    %v336 = vmul.f32 %v320, %v320
    %v337 = vmul.f32 %v321, %v321
    %v338 = vmul.f32 %v322, %v322
    %v339 = vmul.f32 %v323, %v323
    %v340 = vmul.f32 %v324, %v324
    %v341 = vmul.f32 %v325, %v325
    %v342 = vmul.f32 %v326, %v326
    %v343 = vmul.f32 %v327, %v327
    %v344 = vmul.f32 %v328, %v328
    %v345 = vmul.f32 %v329, -0.25
    %v346 = vmul.f32 %v330, -0.25
    %v347 = vmul.f32 %v331, -0.25
    %v348 = vmul.f32 %v332, -0.25
    %v349 = vmul.f32 %v333, -0.25
    %v350 = vmul.f32 %v334, -0.25
    %v351 = vmul.f32 %v335, -0.25
    %v352 = vmul.f32 %v336, -0.25
    %v353 = vmul.f32 %v337, -0.25
    %v354 = vmul.f32 %v338, -0.25
    %v355 = vmul.f32 %v339, -0.25
    %v356 = vmul.f32 %v340, -0.25
    %v357 = vmul.f32 %v341, -0.25
    %v358 = vmul.f32 %v342, -0.25
    %v359 = vmul.f32 %v343, -0.25
    %v360 = vmul.f32 %v344, -0.25
    %v361 = vmul.f32 %v345, %v150
    %v362 = vmul.f32 %v346, %v151
    %v363 = vmul.f32 %v347, %v152
    %v364 = vmul.f32 %v348, %v153
    %v365 = vmul.f32 %v349, %v154
    %v366 = vmul.f32 %v350, %v155
    %v367 = vmul.f32 %v351, %v156
    %v368 = vmul.f32 %v352, %v157
    %v369 = vmul.f32 %v353, %v158
    %v370 = vmul.f32 %v354, %v159
    %v371 = vmul.f32 %v355, %v160
    %v372 = vmul.f32 %v356, %v161
    %v373 = vmul.f32 %v357, %v162
    %v374 = vmul.f32 %v358, %v163
    %v375 = vmul.f32 %v359, %v164
    %v376 = vmul.f32 %v360, %v165
    %v377 = vmul.f32 %v361, %v279
    %v378 = vmul.f32 %v362, %v280
    %v379 = vmul.f32 %v363, %v281
    %v380 = vmul.f32 %v364, %v282
    %v381 = vmul.f32 %v365, %v283
    %v382 = vmul.f32 %v366, %v284
    %v383 = vmul.f32 %v367, %v285
    %v384 = vmul.f32 %v368, %v286
    %v385 = vmul.f32 %v369, %v287
    %v386 = vmul.f32 %v370, %v288
    %v387 = vmul.f32 %v371, %v289
    %v388 = vmul.f32 %v372, %v290
    %v389 = vmul.f32 %v373, %v291
    %v390 = vmul.f32 %v374, %v292
    %v391 = vmul.f32 %v375, %v293
    %v392 = vmul.f32 %v376, %v294
    %v393 = vsel %vm166, %v377, 0.0
    %v394 = vsel %vm166, %v378, 0.0
    %v395 = vadd.f32 %v393, %v394
    %v396 = vsel %vm166, %v379, 0.0
    %v397 = vadd.f32 %v395, %v396
    %v398 = vsel %vm166, %v380, 0.0
    %v399 = vadd.f32 %v397, %v398
    %v400 = vsel %vm166, %v381, 0.0
    %v401 = vadd.f32 %v399, %v400
    %v402 = vsel %vm166, %v382, 0.0
    %v403 = vadd.f32 %v401, %v402
    %v404 = vsel %vm166, %v383, 0.0
    %v405 = vadd.f32 %v403, %v404
    %v406 = vsel %vm166, %v384, 0.0
    %v407 = vadd.f32 %v405, %v406
    %v408 = vsel %vm166, %v385, 0.0
    %v409 = vadd.f32 %v407, %v408
    %v410 = vsel %vm166, %v386, 0.0
    %v411 = vadd.f32 %v409, %v410
    %v412 = vsel %vm166, %v387, 0.0
    %v413 = vadd.f32 %v411, %v412
    %v414 = vsel %vm166, %v388, 0.0
    %v415 = vadd.f32 %v413, %v414
    %v416 = vsel %vm166, %v389, 0.0
    %v417 = vadd.f32 %v415, %v416
    %v418 = vsel %vm166, %v390, 0.0
    %v419 = vadd.f32 %v417, %v418
    %v420 = vsel %vm166, %v391, 0.0
    %v421 = vadd.f32 %v419, %v420
    %v422 = vsel %vm166, %v392, 0.0
    %v423 = vadd.f32 %v421, %v422
    %424 = vadd.xlane.f32.xlu0 %v423
    %v425 = vpop.xlane.xlu0 %424
    %v426 = vrot.slane %v425, 4
    %v427 = vadd.f32 %v425, %v426
    %v428 = vrot.slane %v427, 2
    %v429 = vadd.f32 %v427, %v428
    %v430 = vrot.slane %v429, 1
    %v431 = vadd.f32 %v429, %v430
    %s432 = vtos %v431
    %s433 = smul.f32 %s432, 0.025
    %v434 = vld [vmem:[%s2] sm:$0xf]
    %v435 = vld [vmem:[%s3] sm:$0xf]
    %v436 = vsub.f32 %v434, %v435
    %v437 = vand.u32 2147483647, %v436
    %vm438 = vcmask 125952
    %v439 = vsel %vm438, %v437, 0.0
    %440 = vadd.xlane.f32.xlu0 %v439
    %v441 = vpop.xlane.xlu0 %440
    %v442 = vrot.slane %v441, 4
    %v443 = vadd.f32 %v441, %v442
    %v444 = vrot.slane %v443, 2
    %v445 = vadd.f32 %v443, %v444
    %v446 = vrot.slane %v445, 1
    %v447 = vadd.f32 %v445, %v446
    %s448 = vtos %v447
    %s449 = smul.f32 %s448, 0.2
    %v450 = vld [vmem:[%s4] sm:$0xff]
    %v451 = vld [vmem:[%s4 + $0x8] sm:$0xff]
    %v452 = vld [vmem:[%s4 + $0x10] sm:$0xff]
    %v453 = vld [vmem:[%s4 + $0x18] sm:$0xff]
    %v454 = vld [vmem:[%s4 + $0x20] sm:$0xff]
    %v455 = vld [vmem:[%s4 + $0x28] sm:$0xff]
    %v456 = vld [vmem:[%s4 + $0x30] sm:$0xff]
    %v457 = vld [vmem:[%s4 + $0x38] sm:$0xff]
    %v458 = vld [vmem:[%s4 + $0x40] sm:$0xff]
    %v459 = vld [vmem:[%s4 + $0x48] sm:$0xff]
    %v460 = vld [vmem:[%s4 + $0x50] sm:$0xff]
    %v461 = vld [vmem:[%s4 + $0x58] sm:$0xff]
    %v462 = vld [vmem:[%s4 + $0x60] sm:$0xff]
    %v463 = vld [vmem:[%s4 + $0x68] sm:$0xff]
    %v464 = vld [vmem:[%s4 + $0x70] sm:$0xff]
    %v465 = vld [vmem:[%s4 + $0x78] sm:$0xff]
    %v466 = vld [vmem:[%s5] sm:$0xff]
    %v467 = vld [vmem:[%s5 + $0x8] sm:$0xff]
    %v468 = vld [vmem:[%s5 + $0x10] sm:$0xff]
    %v469 = vld [vmem:[%s5 + $0x18] sm:$0xff]
    %v470 = vld [vmem:[%s5 + $0x20] sm:$0xff]
    %v471 = vld [vmem:[%s5 + $0x28] sm:$0xff]
    %v472 = vld [vmem:[%s5 + $0x30] sm:$0xff]
    %v473 = vld [vmem:[%s5 + $0x38] sm:$0xff]
    %v474 = vld [vmem:[%s5 + $0x40] sm:$0xff]
    %v475 = vld [vmem:[%s5 + $0x48] sm:$0xff]
    %v476 = vld [vmem:[%s5 + $0x50] sm:$0xff]
    %v477 = vld [vmem:[%s5 + $0x58] sm:$0xff]
    %v478 = vld [vmem:[%s5 + $0x60] sm:$0xff]
    %v479 = vld [vmem:[%s5 + $0x68] sm:$0xff]
    %v480 = vld [vmem:[%s5 + $0x70] sm:$0xff]
    %v481 = vld [vmem:[%s5 + $0x78] sm:$0xff]
    %482 = vset.pattern.permute.xlu0 0
    %483 = vperm.xlu0 %482, %v466
    %v484 = vpop.permute.xlu0 %483
    %485 = vset.pattern.permute.xlu0 0
    %486 = vperm.xlu0 %485, %v467
    %v487 = vpop.permute.xlu0 %486
    %488 = vset.pattern.permute.xlu0 0
    %489 = vperm.xlu0 %488, %v468
    %v490 = vpop.permute.xlu0 %489
    %491 = vset.pattern.permute.xlu0 0
    %492 = vperm.xlu0 %491, %v469
    %v493 = vpop.permute.xlu0 %492
    %494 = vset.pattern.permute.xlu0 0
    %495 = vperm.xlu0 %494, %v470
    %v496 = vpop.permute.xlu0 %495
    %497 = vset.pattern.permute.xlu0 0
    %498 = vperm.xlu0 %497, %v471
    %v499 = vpop.permute.xlu0 %498
    %500 = vset.pattern.permute.xlu0 0
    %501 = vperm.xlu0 %500, %v472
    %v502 = vpop.permute.xlu0 %501
    %503 = vset.pattern.permute.xlu0 0
    %504 = vperm.xlu0 %503, %v473
    %v505 = vpop.permute.xlu0 %504
    %506 = vset.pattern.permute.xlu0 0
    %507 = vperm.xlu0 %506, %v474
    %v508 = vpop.permute.xlu0 %507
    %509 = vset.pattern.permute.xlu0 0
    %510 = vperm.xlu0 %509, %v475
    %v511 = vpop.permute.xlu0 %510
    %512 = vset.pattern.permute.xlu0 0
    %513 = vperm.xlu0 %512, %v476
    %v514 = vpop.permute.xlu0 %513
    %515 = vset.pattern.permute.xlu0 0
    %516 = vperm.xlu0 %515, %v477
    %v517 = vpop.permute.xlu0 %516
    %518 = vset.pattern.permute.xlu0 0
    %519 = vperm.xlu0 %518, %v478
    %v520 = vpop.permute.xlu0 %519
    %521 = vset.pattern.permute.xlu0 0
    %522 = vperm.xlu0 %521, %v479
    %v523 = vpop.permute.xlu0 %522
    %524 = vset.pattern.permute.xlu0 0
    %525 = vperm.xlu0 %524, %v480
    %v526 = vpop.permute.xlu0 %525
    %527 = vset.pattern.permute.xlu0 0
    %528 = vperm.xlu0 %527, %v481
    %v529 = vpop.permute.xlu0 %528
    %vm530 = vcmp.eq.s32.totalorder %v69, %v484
    %vm531 = vcmp.eq.s32.totalorder %v69, %v487
    %vm532 = vcmp.eq.s32.totalorder %v69, %v490
    %vm533 = vcmp.eq.s32.totalorder %v69, %v493
    %vm534 = vcmp.eq.s32.totalorder %v69, %v496
    %vm535 = vcmp.eq.s32.totalorder %v69, %v499
    %vm536 = vcmp.eq.s32.totalorder %v69, %v502
    %vm537 = vcmp.eq.s32.totalorder %v69, %v505
    %vm538 = vcmp.eq.s32.totalorder %v69, %v508
    %vm539 = vcmp.eq.s32.totalorder %v69, %v511
    %vm540 = vcmp.eq.s32.totalorder %v69, %v514
    %vm541 = vcmp.eq.s32.totalorder %v69, %v517
    %vm542 = vcmp.eq.s32.totalorder %v69, %v520
    %vm543 = vcmp.eq.s32.totalorder %v69, %v523
    %vm544 = vcmp.eq.s32.totalorder %v69, %v526
    %vm545 = vcmp.eq.s32.totalorder %v69, %v529
    %v546 = vsel %vm530, 1, 0
    %v547 = vsel %vm531, 1, 0
    %v548 = vsel %vm532, 1, 0
    %v549 = vsel %vm533, 1, 0
    %v550 = vsel %vm534, 1, 0
    %v551 = vsel %vm535, 1, 0
    %v552 = vsel %vm536, 1, 0
    %v553 = vsel %vm537, 1, 0
    %v554 = vsel %vm538, 1, 0
    %v555 = vsel %vm539, 1, 0
    %v556 = vsel %vm540, 1, 0
    %v557 = vsel %vm541, 1, 0
    %v558 = vsel %vm542, 1, 0
    %v559 = vsel %vm543, 1, 0
    %v560 = vsel %vm544, 1, 0
    %v561 = vsel %vm545, 1, 0
    %v562 = vcvt.s32.f32 %v546
    %v563 = vcvt.s32.f32 %v547
    %v564 = vcvt.s32.f32 %v548
    %v565 = vcvt.s32.f32 %v549
    %v566 = vcvt.s32.f32 %v550
    %v567 = vcvt.s32.f32 %v551
    %v568 = vcvt.s32.f32 %v552
    %v569 = vcvt.s32.f32 %v553
    %v570 = vcvt.s32.f32 %v554
    %v571 = vcvt.s32.f32 %v555
    %v572 = vcvt.s32.f32 %v556
    %v573 = vcvt.s32.f32 %v557
    %v574 = vcvt.s32.f32 %v558
    %v575 = vcvt.s32.f32 %v559
    %v576 = vcvt.s32.f32 %v560
    %v577 = vcvt.s32.f32 %v561
    %v578 = vsel %vm166, %v450, -inf
    %v579 = vsel %vm166, %v451, -inf
    %v580 = vsel %vm166, %v452, -inf
    %v581 = vmax.f32 %v578, %v580
    %v582 = vsel %vm166, %v453, -inf
    %v583 = vmax.f32 %v579, %v582
    %v584 = vsel %vm166, %v454, -inf
    %v585 = vmax.f32 %v581, %v584
    %v586 = vsel %vm166, %v455, -inf
    %v587 = vmax.f32 %v583, %v586
    %v588 = vsel %vm166, %v456, -inf
    %v589 = vmax.f32 %v585, %v588
    %v590 = vsel %vm166, %v457, -inf
    %v591 = vmax.f32 %v587, %v590
    %v592 = vmax.f32 %v589, %v591
    %v593 = vsel %vm166, %v458, -inf
    %v594 = vsel %vm166, %v459, -inf
    %v595 = vsel %vm166, %v460, -inf
    %v596 = vmax.f32 %v593, %v595
    %v597 = vsel %vm166, %v461, -inf
    %v598 = vmax.f32 %v594, %v597
    %v599 = vsel %vm166, %v462, -inf
    %v600 = vmax.f32 %v596, %v599
    %v601 = vsel %vm166, %v463, -inf
    %v602 = vmax.f32 %v598, %v601
    %v603 = vsel %vm166, %v464, -inf
    %v604 = vmax.f32 %v600, %v603
    %v605 = vsel %vm166, %v465, -inf
    %v606 = vmax.f32 %v602, %v605
    %v607 = vmax.f32 %v604, %v606
    %v608 = vsub.f32 %v450, %v592
    %v609 = vsub.f32 %v451, %v592
    %v610 = vsub.f32 %v452, %v592
    %v611 = vsub.f32 %v453, %v592
    %v612 = vsub.f32 %v454, %v592
    %v613 = vsub.f32 %v455, %v592
    %v614 = vsub.f32 %v456, %v592
    %v615 = vsub.f32 %v457, %v592
    %v616 = vsub.f32 %v458, %v607
    %v617 = vsub.f32 %v459, %v607
    %v618 = vsub.f32 %v460, %v607
    %v619 = vsub.f32 %v461, %v607
    %v620 = vsub.f32 %v462, %v607
    %v621 = vsub.f32 %v463, %v607
    %v622 = vsub.f32 %v464, %v607
    %v623 = vsub.f32 %v465, %v607
    %v624 = vmul.f32 %v608, 1.442695
    %v625 = vpow.pop %v624
    %v626 = vmul.f32 %v609, 1.442695
    %v627 = vpow.pop %v626
    %v628 = vmul.f32 %v610, 1.442695
    %v629 = vpow.pop %v628
    %v630 = vmul.f32 %v611, 1.442695
    %v631 = vpow.pop %v630
    %v632 = vmul.f32 %v612, 1.442695
    %v633 = vpow.pop %v632
    %v634 = vmul.f32 %v613, 1.442695
    %v635 = vpow.pop %v634
    %v636 = vmul.f32 %v614, 1.442695
    %v637 = vpow.pop %v636
    %v638 = vmul.f32 %v615, 1.442695
    %v639 = vpow.pop %v638
    %v640 = vmul.f32 %v616, 1.442695
    %v641 = vpow.pop %v640
    %v642 = vmul.f32 %v617, 1.442695
    %v643 = vpow.pop %v642
    %v644 = vmul.f32 %v618, 1.442695
    %v645 = vpow.pop %v644
    %v646 = vmul.f32 %v619, 1.442695
    %v647 = vpow.pop %v646
    %v648 = vmul.f32 %v620, 1.442695
    %v649 = vpow.pop %v648
    %v650 = vmul.f32 %v621, 1.442695
    %v651 = vpow.pop %v650
    %v652 = vmul.f32 %v622, 1.442695
    %v653 = vpow.pop %v652
    %v654 = vmul.f32 %v623, 1.442695
    %v655 = vpow.pop %v654
    %v656 = vsel %vm166, %v625, 0.0
    %v657 = vsel %vm166, %v627, 0.0
    %v658 = vadd.f32 %v656, %v657
    %v659 = vsel %vm166, %v629, 0.0
    %v660 = vadd.f32 %v658, %v659
    %v661 = vsel %vm166, %v631, 0.0
    %v662 = vadd.f32 %v660, %v661
    %v663 = vsel %vm166, %v633, 0.0
    %v664 = vadd.f32 %v662, %v663
    %v665 = vsel %vm166, %v635, 0.0
    %v666 = vadd.f32 %v664, %v665
    %v667 = vsel %vm166, %v637, 0.0
    %v668 = vadd.f32 %v666, %v667
    %v669 = vsel %vm166, %v639, 0.0
    %v670 = vadd.f32 %v668, %v669
    %v671 = vsel %vm166, %v641, 0.0
    %v672 = vsel %vm166, %v643, 0.0
    %v673 = vadd.f32 %v671, %v672
    %v674 = vsel %vm166, %v645, 0.0
    %v675 = vadd.f32 %v673, %v674
    %v676 = vsel %vm166, %v647, 0.0
    %v677 = vadd.f32 %v675, %v676
    %v678 = vsel %vm166, %v649, 0.0
    %v679 = vadd.f32 %v677, %v678
    %v680 = vsel %vm166, %v651, 0.0
    %v681 = vadd.f32 %v679, %v680
    %v682 = vsel %vm166, %v653, 0.0
    %v683 = vadd.f32 %v681, %v682
    %v684 = vsel %vm166, %v655, 0.0
    %v685 = vadd.f32 %v683, %v684
    %v686 = vlog2.pop %v670
    %v687 = vmul.f32 %v686, 0.6931472
    %v688 = vlog2.pop %v685
    %v689 = vmul.f32 %v688, 0.6931472
    %v690 = vsub.f32 %v608, %v687
    %v691 = vsub.f32 %v609, %v687
    %v692 = vsub.f32 %v610, %v687
    %v693 = vsub.f32 %v611, %v687
    %v694 = vsub.f32 %v612, %v687
    %v695 = vsub.f32 %v613, %v687
    %v696 = vsub.f32 %v614, %v687
    %v697 = vsub.f32 %v615, %v687
    %v698 = vsub.f32 %v616, %v689
    %v699 = vsub.f32 %v617, %v689
    %v700 = vsub.f32 %v618, %v689
    %v701 = vsub.f32 %v619, %v689
    %v702 = vsub.f32 %v620, %v689
    %v703 = vsub.f32 %v621, %v689
    %v704 = vsub.f32 %v622, %v689
    %v705 = vsub.f32 %v623, %v689
    %v706 = vrcp.pop %v670
    %v707 = vrcp.pop %v685
    %v708 = vmul.f32 %v625, %v706
    %v709 = vmul.f32 %v627, %v706
    %v710 = vmul.f32 %v629, %v706
    %v711 = vmul.f32 %v631, %v706
    %v712 = vmul.f32 %v633, %v706
    %v713 = vmul.f32 %v635, %v706
    %v714 = vmul.f32 %v637, %v706
    %v715 = vmul.f32 %v639, %v706
    %v716 = vmul.f32 %v641, %v707
    %v717 = vmul.f32 %v643, %v707
    %v718 = vmul.f32 %v645, %v707
    %v719 = vmul.f32 %v647, %v707
    %v720 = vmul.f32 %v649, %v707
    %v721 = vmul.f32 %v651, %v707
    %v722 = vmul.f32 %v653, %v707
    %v723 = vmul.f32 %v655, %v707
    %v724 = vsub.f32 1.0, %v708
    %v725 = vsub.f32 1.0, %v709
    %v726 = vsub.f32 1.0, %v710
    %v727 = vsub.f32 1.0, %v711
    %v728 = vsub.f32 1.0, %v712
    %v729 = vsub.f32 1.0, %v713
    %v730 = vsub.f32 1.0, %v714
    %v731 = vsub.f32 1.0, %v715
    %v732 = vsub.f32 1.0, %v716
    %v733 = vsub.f32 1.0, %v717
    %v734 = vsub.f32 1.0, %v718
    %v735 = vsub.f32 1.0, %v719
    %v736 = vsub.f32 1.0, %v720
    %v737 = vsub.f32 1.0, %v721
    %v738 = vsub.f32 1.0, %v722
    %v739 = vsub.f32 1.0, %v723
    %v740 = vmul.f32 %v724, %v724
    %v741 = vmul.f32 %v725, %v725
    %v742 = vmul.f32 %v726, %v726
    %v743 = vmul.f32 %v727, %v727
    %v744 = vmul.f32 %v728, %v728
    %v745 = vmul.f32 %v729, %v729
    %v746 = vmul.f32 %v730, %v730
    %v747 = vmul.f32 %v731, %v731
    %v748 = vmul.f32 %v732, %v732
    %v749 = vmul.f32 %v733, %v733
    %v750 = vmul.f32 %v734, %v734
    %v751 = vmul.f32 %v735, %v735
    %v752 = vmul.f32 %v736, %v736
    %v753 = vmul.f32 %v737, %v737
    %v754 = vmul.f32 %v738, %v738
    %v755 = vmul.f32 %v739, %v739
    %v756 = vmul.f32 %v740, -0.25
    %v757 = vmul.f32 %v741, -0.25
    %v758 = vmul.f32 %v742, -0.25
    %v759 = vmul.f32 %v743, -0.25
    %v760 = vmul.f32 %v744, -0.25
    %v761 = vmul.f32 %v745, -0.25
    %v762 = vmul.f32 %v746, -0.25
    %v763 = vmul.f32 %v747, -0.25
    %v764 = vmul.f32 %v748, -0.25
    %v765 = vmul.f32 %v749, -0.25
    %v766 = vmul.f32 %v750, -0.25
    %v767 = vmul.f32 %v751, -0.25
    %v768 = vmul.f32 %v752, -0.25
    %v769 = vmul.f32 %v753, -0.25
    %v770 = vmul.f32 %v754, -0.25
    %v771 = vmul.f32 %v755, -0.25
    %v772 = vmul.f32 %v756, %v562
    %v773 = vmul.f32 %v757, %v563
    %v774 = vmul.f32 %v758, %v564
    %v775 = vmul.f32 %v759, %v565
    %v776 = vmul.f32 %v760, %v566
    %v777 = vmul.f32 %v761, %v567
    %v778 = vmul.f32 %v762, %v568
    %v779 = vmul.f32 %v763, %v569
    %v780 = vmul.f32 %v764, %v570
    %v781 = vmul.f32 %v765, %v571
    %v782 = vmul.f32 %v766, %v572
    %v783 = vmul.f32 %v767, %v573
    %v784 = vmul.f32 %v768, %v574
    %v785 = vmul.f32 %v769, %v575
    %v786 = vmul.f32 %v770, %v576
    %v787 = vmul.f32 %v771, %v577
    %v788 = vmul.f32 %v772, %v690
    %v789 = vmul.f32 %v773, %v691
    %v790 = vmul.f32 %v774, %v692
    %v791 = vmul.f32 %v775, %v693
    %v792 = vmul.f32 %v776, %v694
    %v793 = vmul.f32 %v777, %v695
    %v794 = vmul.f32 %v778, %v696
    %v795 = vmul.f32 %v779, %v697
    %v796 = vmul.f32 %v780, %v698
    %v797 = vmul.f32 %v781, %v699
    %v798 = vmul.f32 %v782, %v700
    %v799 = vmul.f32 %v783, %v701
    %v800 = vmul.f32 %v784, %v702
    %v801 = vmul.f32 %v785, %v703
    %v802 = vmul.f32 %v786, %v704
    %v803 = vmul.f32 %v787, %v705
    %v804 = vsel %vm166, %v788, 0.0
    %v805 = vsel %vm166, %v789, 0.0
    %v806 = vadd.f32 %v804, %v805
    %v807 = vsel %vm166, %v790, 0.0
    %v808 = vadd.f32 %v806, %v807
    %v809 = vsel %vm166, %v791, 0.0
    %v810 = vadd.f32 %v808, %v809
    %v811 = vsel %vm166, %v792, 0.0
    %v812 = vadd.f32 %v810, %v811
    %v813 = vsel %vm166, %v793, 0.0
    %v814 = vadd.f32 %v812, %v813
    %v815 = vsel %vm166, %v794, 0.0
    %v816 = vadd.f32 %v814, %v815
    %v817 = vsel %vm166, %v795, 0.0
    %v818 = vadd.f32 %v816, %v817
    %v819 = vsel %vm166, %v796, 0.0
    %v820 = vadd.f32 %v818, %v819
    %v821 = vsel %vm166, %v797, 0.0
    %v822 = vadd.f32 %v820, %v821
    %v823 = vsel %vm166, %v798, 0.0
    %v824 = vadd.f32 %v822, %v823
    %v825 = vsel %vm166, %v799, 0.0
    %v826 = vadd.f32 %v824, %v825
    %v827 = vsel %vm166, %v800, 0.0
    %v828 = vadd.f32 %v826, %v827
    %v829 = vsel %vm166, %v801, 0.0
    %v830 = vadd.f32 %v828, %v829
    %v831 = vsel %vm166, %v802, 0.0
    %v832 = vadd.f32 %v830, %v831
    %v833 = vsel %vm166, %v803, 0.0
    %v834 = vadd.f32 %v832, %v833
    %835 = vadd.xlane.f32.xlu0 %v834
    %v836 = vpop.xlane.xlu0 %835
    %v837 = vrot.slane %v836, 4
    %v838 = vadd.f32 %v836, %v837
    %v839 = vrot.slane %v838, 2
    %v840 = vadd.f32 %v838, %v839
    %v841 = vrot.slane %v840, 1
    %v842 = vadd.f32 %v840, %v841
    %s843 = vtos %v842
    %s844 = smul.f32 %s843, 0.025
    %v845 = vld [vmem:[%s6] sm:$0x1f]
    %v846 = vld [vmem:[%s7] sm:$0x1f]
    %v847 = vsub.f32 %v845, %v846
    %v848 = vand.u32 2147483647, %v847
    %vm849 = vcmask 126976
    %v850 = vsel %vm849, %v848, 0.0
    %851 = vadd.xlane.f32.xlu0 %v850
    %v852 = vpop.xlane.xlu0 %851
    %v853 = vrot.slane %v852, 4
    %v854 = vadd.f32 %v852, %v853
    %v855 = vrot.slane %v854, 2
    %v856 = vadd.f32 %v854, %v855
    %v857 = vrot.slane %v856, 1
    %v858 = vadd.f32 %v856, %v857
    %s859 = vtos %v858
    %s860 = smul.f32 %s859, 0.2
    %v861 = vld [vmem:[%s8] sm:$0xff]
    %v862 = vld [vmem:[%s8 + $0x8] sm:$0xff]
    %v863 = vld [vmem:[%s8 + $0x10] sm:$0xff]
    %v864 = vld [vmem:[%s8 + $0x18] sm:$0xff]
    %v865 = vld [vmem:[%s9] sm:$0xff]
    %v866 = vld [vmem:[%s9 + $0x8] sm:$0xff]
    %v867 = vld [vmem:[%s9 + $0x10] sm:$0xff]
    %v868 = vld [vmem:[%s9 + $0x18] sm:$0xff]
    %vm869 = vcmp.eq.s32.totalorder %v69, %v865
    %vm870 = vcmp.eq.s32.totalorder %v69, %v866
    %vm871 = vcmp.eq.s32.totalorder %v69, %v867
    %vm872 = vcmp.eq.s32.totalorder %v69, %v868
    %v873 = vsel %vm869, 1, 0
    %v874 = vsel %vm870, 1, 0
    %v875 = vsel %vm871, 1, 0
    %v876 = vsel %vm872, 1, 0
    %v877 = vcvt.s32.f32 %v873
    %v878 = vcvt.s32.f32 %v874
    %v879 = vcvt.s32.f32 %v875
    %v880 = vcvt.s32.f32 %v876
    %v881 = vand.u32 2147483647, %v861
    %v882 = vand.u32 2147483647, %v862
    %v883 = vand.u32 2147483647, %v863
    %v884 = vand.u32 2147483647, %v864
    %v885 = vsub.f32 0.0, %v881
    %v886 = vsub.f32 0.0, %v882
    %v887 = vsub.f32 0.0, %v883
    %v888 = vsub.f32 0.0, %v884
    %v889 = vmul.f32 %v885, 1.442695
    %v890 = vpow.pop %v889
    %v891 = vmul.f32 %v886, 1.442695
    %v892 = vpow.pop %v891
    %v893 = vmul.f32 %v887, 1.442695
    %v894 = vpow.pop %v893
    %v895 = vmul.f32 %v888, 1.442695
    %v896 = vpow.pop %v895
    %v897 = vadd.f32 %v890, 1.0
    %v898 = vadd.f32 %v892, 1.0
    %v899 = vadd.f32 %v894, 1.0
    %v900 = vadd.f32 %v896, 1.0
    %v901 = vrcp.pop %v897
    %v902 = vrcp.pop %v898
    %v903 = vrcp.pop %v899
    %v904 = vrcp.pop %v900
    %vm905 = vcmp.ge.f32.partialorder %v861, 0.0
    %vm906 = vcmp.ge.f32.partialorder %v862, 0.0
    %vm907 = vcmp.ge.f32.partialorder %v863, 0.0
    %vm908 = vcmp.ge.f32.partialorder %v864, 0.0
    %v909 = vmul.f32 %v890, %v901
    %v910 = vmul.f32 %v892, %v902
    %v911 = vmul.f32 %v894, %v903
    %v912 = vmul.f32 %v896, %v904
    %v913 = vsel %vm905, %v901, %v909
    %v914 = vsel %vm906, %v902, %v910
    %v915 = vsel %vm907, %v903, %v911
    %v916 = vsel %vm908, %v904, %v912
    %v917 = vmax.f32 %v861, 0.0
    %v918 = vmax.f32 %v862, 0.0
    %v919 = vmax.f32 %v863, 0.0
    %v920 = vmax.f32 %v864, 0.0
    %v921 = vmul.f32 %v861, %v877
    %v922 = vmul.f32 %v862, %v878
    %v923 = vmul.f32 %v863, %v879
    %v924 = vmul.f32 %v864, %v880
    %v925 = vsub.f32 %v917, %v921
    %v926 = vsub.f32 %v918, %v922
    %v927 = vsub.f32 %v919, %v923
    %v928 = vsub.f32 %v920, %v924
    %v929 = vlog2.pop %v897
    %v930 = vmul.f32 %v929, 0.6931472
    %v931 = vlog2.pop %v898
    %v932 = vmul.f32 %v931, 0.6931472
    %v933 = vlog2.pop %v899
    %v934 = vmul.f32 %v933, 0.6931472
    %v935 = vlog2.pop %v900
    %v936 = vmul.f32 %v935, 0.6931472
    %v937 = vadd.f32 %v925, %v930
    %v938 = vadd.f32 %v926, %v932
    %v939 = vadd.f32 %v927, %v934
    %v940 = vadd.f32 %v928, %v936
    %v941 = vmul.f32 %v913, %v877
    %v942 = vmul.f32 %v914, %v878
    %v943 = vmul.f32 %v915, %v879
    %v944 = vmul.f32 %v916, %v880
    %v945 = vsub.f32 1.0, %v913
    %v946 = vsub.f32 1.0, %v914
    %v947 = vsub.f32 1.0, %v915
    %v948 = vsub.f32 1.0, %v916
    %v949 = vsub.f32 1.0, %v877
    %v950 = vsub.f32 1.0, %v878
    %v951 = vsub.f32 1.0, %v879
    %v952 = vsub.f32 1.0, %v880
    %v953 = vmul.f32 %v945, %v949
    %v954 = vmul.f32 %v946, %v950
    %v955 = vmul.f32 %v947, %v951
    %v956 = vmul.f32 %v948, %v952
    %v957 = vadd.f32 %v941, %v953
    %v958 = vadd.f32 %v942, %v954
    %v959 = vadd.f32 %v943, %v955
    %v960 = vadd.f32 %v944, %v956
    %v961 = vsub.f32 1.0, %v957
    %v962 = vsub.f32 1.0, %v958
    %v963 = vsub.f32 1.0, %v959
    %v964 = vsub.f32 1.0, %v960
    %v965 = vmul.f32 %v961, %v961
    %v966 = vmul.f32 %v962, %v962
    %v967 = vmul.f32 %v963, %v963
    %v968 = vmul.f32 %v964, %v964
    %v969 = vmul.f32 %v937, %v965
    %v970 = vmul.f32 %v938, %v966
    %v971 = vmul.f32 %v939, %v967
    %v972 = vmul.f32 %v940, %v968
    %v973 = vmul.f32 %v877, 0.25
    %v974 = vmul.f32 %v878, 0.25
    %v975 = vmul.f32 %v879, 0.25
    %v976 = vmul.f32 %v880, 0.25
    %v977 = vmul.f32 %v949, 0.75
    %v978 = vmul.f32 %v950, 0.75
    %v979 = vmul.f32 %v951, 0.75
    %v980 = vmul.f32 %v952, 0.75
    %v981 = vadd.f32 %v973, %v977
    %v982 = vadd.f32 %v974, %v978
    %v983 = vadd.f32 %v975, %v979
    %v984 = vadd.f32 %v976, %v980
    %v985 = vmul.f32 %v981, %v969
    %v986 = vmul.f32 %v982, %v970
    %v987 = vmul.f32 %v983, %v971
    %v988 = vmul.f32 %v984, %v972
    %vm989 = vcmask 7168
    %v990 = vsel %vm989, %v985, 0.0
    %v991 = vsel %vm989, %v986, 0.0
    %v992 = vadd.f32 %v990, %v991
    %v993 = vsel %vm989, %v987, 0.0
    %v994 = vadd.f32 %v992, %v993
    %v995 = vsel %vm989, %v988, 0.0
    %v996 = vadd.f32 %v994, %v995
    %997 = vadd.xlane.f32.xlu0 %v996
    %v998 = vpop.xlane.xlu0 %997
    %v999 = vrot.slane %v998, 4
    %v1000 = vadd.f32 %v998, %v999
    %v1001 = vrot.slane %v1000, 2
    %v1002 = vadd.f32 %v1000, %v1001
    %v1003 = vrot.slane %v1002, 1
    %v1004 = vadd.f32 %v1002, %v1003
    %s1005 = vtos %v1004
    %s1006 = smul.f32 %s1005, 0.2
    %vm1007 = vcmp.eq.s32.totalorder %v69, 0
    %v1008 = vstv %s433
    %v1009 = vsel %vm1007, %v1008, 0.0
    %v1010 = vadd.f32 %v1009, 0.0
    %vm1011 = vcmp.eq.s32.totalorder %v69, 1
    %v1012 = vstv %s449
    %v1013 = vsel %vm1011, %v1012, 0.0
    %v1014 = vadd.f32 %v1010, %v1013
    %vm1015 = vcmp.eq.s32.totalorder %v69, 2
    %v1016 = vstv %s844
    %v1017 = vsel %vm1015, %v1016, 0.0
    %v1018 = vadd.f32 %v1014, %v1017
    %vm1019 = vcmp.eq.s32.totalorder %v69, 3
    %v1020 = vstv %s860
    %v1021 = vsel %vm1019, %v1020, 0.0
    %v1022 = vadd.f32 %v1018, %v1021
    %vm1023 = vcmp.eq.s32.totalorder %v69, 4
    %v1024 = vstv %s1006
    %v1025 = vsel %vm1023, %v1024, 0.0
    %v1026 = vadd.f32 %v1022, %v1025
    %1027 = vst [vmem:[#allocation2] sm:$0x1] %v1026
    // Predicated region
    $region42: #{tpu_custom_call.1} parent=1 // pred_check
      _
    $region43: #{tpu_custom_call.1} parent=1 // pred_check_branch
      %1029 = sbr.rel (0) target = $region45
    $region44: #{tpu_custom_call.1} parent=1 // pred_region
      %s1031 = ssub.s32 16, 16
      %1032 = vsyncadd [#allocation3], %s1031
      %s1034 = sshll.u32 [#allocation2], 4
      %s1035 = int_to_ptr.vmem [resolvable:$true] %s1034
      %1037 = dma.vmem_to_hbm [thread:$0]  %s1035, 16, %s10, [#allocation3]
    $region45: #{tpu_custom_call.1} parent=1 // pred_fallthru
      _
    // Predicated region
    $region46: #{tpu_custom_call.1} parent=1 // pred_check
      _
    $region47: #{tpu_custom_call.1} parent=1 // pred_check_branch
      %1039 = sbr.rel (0) target = $region49
    $region48: #{tpu_custom_call.1} parent=1 // pred_region
      %1040 = dma.done [#allocation3], 16
    $region49: #{tpu_custom_call.1} parent=1 // pred_fallthru
      _
    %1041 = vsyncpa [#allocation3], 1

</llo_original>
